<compile_context>
chip_gen: v6e
topology: v6e:2x2x1
jax: 0.10.0
libtpu: 0.0.40
codegen_flags: <defaults>
</compile_context>

<pallas_src>
import jax
import jax.numpy as jnp
from jax import lax
from jax.experimental import pallas as pl
from jax.experimental.pallas import tpu as pltpu


WIDTH = 128        # hidden width from the module
IN_SIZE = 1        # input_size default
OUT_SIZE = 1       # l3 out features
TM = 512           # batch rows per grid step (lane-axis tile; multiple of CHUNK)
CHUNK = 128        # lanes per in-kernel sub-chunk; keeps live vregs ~<50 (no spill)


def _make_mlp_kernel(num_chunks, chunk):
    """Kernel factory so the in-kernel chunk loop trip-count is static."""

    def kernel(x_ref, small_ref, w2t_ref, w3row_ref, b3_ref, o_ref):
        # Loop-invariant operands (the chunk loop below is fully unrolled, so
        # these loads are hoisted/shared across all chunks).
        w1t = small_ref[:, 0:1]          # (WIDTH, 1)  column 0 = w1^T
        b1t = small_ref[:, 1:2]          # (WIDTH, 1)  column 1 = b1^T
        b2t = small_ref[:, 2:3]          # (WIDTH, 1)  column 2 = b2^T
        w2t = w2t_ref[...]               # (WIDTH, WIDTH)
        w3r = w3row_ref[...]             # (1, WIDTH)
        b3 = b3_ref[...]                 # (1, 1)

        def body(c, carry):
            off = pl.multiple_of(c * chunk, chunk)
            xb = x_ref[:, pl.ds(off, chunk)]                     # (1, CHUNK)

            # Layer 1: in_features == 1 -> VPU outer product (no K=1 MXU matmul).
            h1 = jnp.maximum(w1t * xb + b1t, 0.0)                # (WIDTH, CHUNK)

            # Layer 2: dense 128x128 matmul on the MXU; bias+ReLU epilogue
            # applied immediately on the chunk still in vregs.
            h2 = jnp.dot(w2t, h1, preferred_element_type=jnp.float32)
            h2 = jnp.maximum(h2 + b2t, 0.0)                      # (WIDTH, CHUNK)

            # Layer 3: out_features == 1 as a (1,128)@(128,CHUNK) matvec on the
            # MXU (it has slack) instead of a VALU multiply + XLU reduce.
            h3 = jnp.dot(w3r, h2, preferred_element_type=jnp.float32) + b3

            # is_critic=False branch: tanh (EUP), stored lane-dense.
            o_ref[:, pl.ds(off, chunk)] = jnp.tanh(h3).astype(o_ref.dtype)
            return carry

        # Fully-unrolled short loop: gives the LLO scheduler visibility while
        # bounding live ranges to one chunk's intermediates.
        lax.fori_loop(0, num_chunks, body, 0, unroll=True)

    return kernel


def net_forward(x, params, *, tm=TM, chunk=CHUNK):
    """x: (N, 1) float32. params: dict of w1,b1,w2,b2,w3,b3 in (in, out) layout.

    Returns (N, 1) float32 = tanh(L3(relu(L2(relu(L1(x)))))).
    Pads N up to a multiple of `tm` internally and slices the padding off.
    Pick tm so the grid length stays >= 2 on v7x (keeps both TensorCores busy);
    for very large N on v6e, raise tm (per-step VMEM stays tiny after chunking).
    """
    assert tm % chunk == 0 and chunk % 128 == 0

    w1, b1 = params["w1"], params["b1"]   # (1, 128), (1, 128)
    w2, b2 = params["w2"], params["b2"]   # (128, 128), (1, 128)
    w3, b3 = params["w3"], params["b3"]   # (128, 1), (1, 1)

    N = x.shape[0]
    num_tiles = pl.cdiv(N, tm)
    n_pad = num_tiles * tm

    # Batch on the lane axis: a single (1, n_pad) row, tiled in (1, tm) blocks.
    x_row = jnp.pad(x.reshape(N), (0, n_pad - N)).reshape(1, n_pad)

    # One-time transposes into lane-friendly (hidden-on-sublane) layouts.  The
    # three (WIDTH, 1) operands are packed into one (WIDTH, 3) block so the
    # pipeline moves a single padded lane tile / DMA instead of three.
    small = jnp.concatenate([w1.T, b1.T, b2.T], axis=1)   # (WIDTH, 3)
    w2t = w2.T                                            # (WIDTH, WIDTH)
    w3row = w3.T                                          # (1, WIDTH)
    b3s = b3.reshape(1, 1)                                # (1, 1)

    flops = 2 * n_pad * (WIDTH * WIDTH + 2 * WIDTH)
    bytes_accessed = 2 * n_pad * 4 + 4 * (WIDTH * WIDTH + 4 * WIDTH + 1)
    cost = pl.CostEstimate(flops=flops, transcendentals=n_pad,
                           bytes_accessed=bytes_accessed)

    kernel = _make_mlp_kernel(num_chunks=tm // chunk, chunk=chunk)

    out = pl.pallas_call(
        kernel,
        out_shape=jax.ShapeDtypeStruct((1, n_pad), jnp.float32),
        grid_spec=pltpu.PrefetchScalarGridSpec(
            num_scalar_prefetch=0,
            grid=(num_tiles,),
            in_specs=[
                pl.BlockSpec((1, tm), lambda i: (0, i)),            # x (lane-tiled)
                pl.BlockSpec((WIDTH, 3), lambda i: (0, 0)),         # [w1^T|b1^T|b2^T]
                pl.BlockSpec((WIDTH, WIDTH), lambda i: (0, 0)),     # w2^T (resident)
                pl.BlockSpec((1, WIDTH), lambda i: (0, 0)),         # w3 row
                pl.BlockSpec((1, 1), lambda i: (0, 0)),             # b3
            ],
            out_specs=pl.BlockSpec((1, tm), lambda i: (0, i)),      # lane-dense out
        ),
        compiler_params=pltpu.CompilerParams(
            dimension_semantics=("parallel",)),
        cost_estimate=cost,
    )(x_row, small, w2t, w3row, b3s)

    # Padded rows produce tanh(garbage); slice them off before returning.
    return out[0, :N].reshape(N, 1)


def init_params(key):
    """Deterministic init mirroring nn.Linear shapes (stored as (in, out))."""
    k1, k2, k3, k4, k5, k6 = jax.random.split(key, 6)

    def uniform(k, shape, fan_in):
        bound = 1.0 / jnp.sqrt(jnp.float32(fan_in))
        return jax.random.uniform(k, shape, jnp.float32, -bound, bound)

    return {
        "w1": uniform(k1, (IN_SIZE, WIDTH), IN_SIZE),
        "b1": uniform(k2, (1, WIDTH), IN_SIZE),
        "w2": uniform(k3, (WIDTH, WIDTH), WIDTH),
        "b2": uniform(k4, (1, WIDTH), WIDTH),
        "w3": uniform(k5, (WIDTH, OUT_SIZE), WIDTH),
        "b3": uniform(k6, (1, OUT_SIZE), WIDTH),
    }


if __name__ == "__main__":
    key = jax.random.PRNGKey(0)
    params = init_params(key)

    # Input analogous to the script's x = arange(-1, 1.01, 0.01).reshape(-1, 1),
    # sized so the grid has 2 steps of TM=512 rows (keeps both v7x cores busy).
    N = 1024
    x = jnp.linspace(-1.0, 1.0, N, dtype=jnp.float32).reshape(N, 1)

    out = net_forward(x, params)
    out = jax.block_until_ready(out)

    # Pure-JAX reference check.
    h = jnp.maximum(x @ params["w1"] + params["b1"], 0.0)
    h = jnp.maximum(h @ params["w2"] + params["b2"], 0.0)
    ref = jnp.tanh(h @ params["w3"] + params["b3"])
    assert out.shape == (N, 1)
    assert jnp.allclose(out, ref, atol=1e-4, rtol=1e-5), float(
        jnp.max(jnp.abs(out - ref)))

    print("KERNEL_OK")
</pallas_src>

<mosaic_0001>
module attributes {stable_mosaic.version = 11 : i64} {
  func.func @kernel(%arg0: i32, %arg1: memref<1x512xf32, #tpu.memory_space<vmem>>, %arg2: memref<128x3xf32, #tpu.memory_space<vmem>>, %arg3: memref<128x128xf32, #tpu.memory_space<vmem>>, %arg4: memref<1x128xf32, #tpu.memory_space<vmem>>, %arg5: memref<1x1xf32, #tpu.memory_space<vmem>>, %arg6: memref<1x512xf32, #tpu.memory_space<vmem>>) attributes {dimension_semantics = [#tpu.dimension_semantics<parallel>], iteration_bounds = array<i64: 2>, scalar_prefetch = 0 : i64, scratch_operands = 0 : i64, tpu.core_type = #tpu.core_type<tc>, window_params = [{transform_indices = @transform_0, window_bounds = array<i64: 1, 512>}, {pipeline_mode = #tpu.pipeline_mode<synchronous>, transform_indices = @transform_1, window_bounds = array<i64: 128, 3>}, {pipeline_mode = #tpu.pipeline_mode<synchronous>, transform_indices = @transform_2, window_bounds = array<i64: 128, 128>}, {pipeline_mode = #tpu.pipeline_mode<synchronous>, transform_indices = @transform_3, window_bounds = array<i64: 1, 128>}, {pipeline_mode = #tpu.pipeline_mode<synchronous>, transform_indices = @transform_4, window_bounds = array<i64: 1, 1>}, {transform_indices = @transform_5, window_bounds = array<i64: 1, 512>}]} {
    %c0 = arith.constant 0 : index
    %c0_0 = arith.constant 0 : index
    %0 = vector.load %arg2[%c0, %c0_0] : memref<128x3xf32, #tpu.memory_space<vmem>>, vector<128x1xf32>
    %c0_1 = arith.constant 0 : index
    %c1 = arith.constant 1 : index
    %1 = vector.load %arg2[%c0_1, %c1] : memref<128x3xf32, #tpu.memory_space<vmem>>, vector<128x1xf32>
    %c0_2 = arith.constant 0 : index
    %c2 = arith.constant 2 : index
    %2 = vector.load %arg2[%c0_2, %c2] : memref<128x3xf32, #tpu.memory_space<vmem>>, vector<128x1xf32>
    %c0_3 = arith.constant 0 : index
    %c0_4 = arith.constant 0 : index
    %3 = vector.load %arg3[%c0_3, %c0_4] : memref<128x128xf32, #tpu.memory_space<vmem>>, vector<128x128xf32>
    %c0_5 = arith.constant 0 : index
    %c0_6 = arith.constant 0 : index
    %4 = vector.load %arg4[%c0_5, %c0_6] : memref<1x128xf32, #tpu.memory_space<vmem>>, vector<1x128xf32>
    %c0_7 = arith.constant 0 : index
    %c0_8 = arith.constant 0 : index
    %5 = vector.load %arg5[%c0_7, %c0_8] : memref<1x1xf32, #tpu.memory_space<vmem>>, vector<1x1xf32>
    %c0_i32 = arith.constant 0 : i32
    %c128_i32 = arith.constant 128 : i32
    %6 = arith.muli %c0_i32, %c128_i32 : i32
    %7 = tpu.assume_multiple %6, 128 : i32
    %c0_9 = arith.constant 0 : index
    %8 = arith.index_cast %7 : i32 to index
    %9 = vector.load %arg1[%c0_9, %8] : memref<1x512xf32, #tpu.memory_space<vmem>>, vector<1x128xf32>
    %10 = vector.broadcast %0 : vector<128x1xf32> to vector<128x128xf32>
    %11 = vector.broadcast %9 : vector<1x128xf32> to vector<128x128xf32>
    %12 = arith.mulf %10, %11 : vector<128x128xf32>
    %13 = vector.broadcast %1 : vector<128x1xf32> to vector<128x128xf32>
    %14 = arith.addf %12, %13 : vector<128x128xf32>
    %cst = arith.constant 0.000000e+00 : f32
    %15 = vector.broadcast %cst : f32 to vector<128x128xf32>
    %16 = arith.maximumf %14, %15 : vector<128x128xf32>
    %cst_10 = arith.constant dense<0.000000e+00> : vector<128x128xf32>
    %17 = tpu.matmul %3, %16, %cst_10 {dimension_numbers = #tpu.dot_dimension_numbers<[1], [0], [0], [1], [0, 0, 1, 1], [], []>} : vector<128x128xf32>, vector<128x128xf32>, vector<128x128xf32> -> vector<128x128xf32>
    %18 = vector.broadcast %2 : vector<128x1xf32> to vector<128x128xf32>
    %19 = arith.addf %17, %18 : vector<128x128xf32>
    %cst_11 = arith.constant 0.000000e+00 : f32
    %20 = vector.broadcast %cst_11 : f32 to vector<128x128xf32>
    %21 = arith.maximumf %19, %20 : vector<128x128xf32>
    %cst_12 = arith.constant dense<0.000000e+00> : vector<1x128xf32>
    %22 = tpu.matmul %4, %21, %cst_12 {dimension_numbers = #tpu.dot_dimension_numbers<[1], [0], [0], [1], [0, 0, 1, 1], [], []>} : vector<1x128xf32>, vector<128x128xf32>, vector<1x128xf32> -> vector<1x128xf32>
    %23 = vector.broadcast %5 : vector<1x1xf32> to vector<1x128xf32>
    %24 = arith.addf %22, %23 : vector<1x128xf32>
    %25 = math.tanh %24 : vector<1x128xf32>
    %c0_13 = arith.constant 0 : index
    %26 = arith.index_cast %7 : i32 to index
    %27 = vector.load %arg6[%c0_13, %26] : memref<1x512xf32, #tpu.memory_space<vmem>>, vector<1x128xf32>
    tpu.vector_store %arg6[%c0_13, %26], %25 {strides = array<i32>} : memref<1x512xf32, #tpu.memory_space<vmem>>, vector<1x128xf32>,
    %c1_i32 = arith.constant 1 : i32
    %c128_i32_14 = arith.constant 128 : i32
    %28 = arith.muli %c1_i32, %c128_i32_14 : i32
    %29 = tpu.assume_multiple %28, 128 : i32
    %c0_15 = arith.constant 0 : index
    %30 = arith.index_cast %29 : i32 to index
    %31 = vector.load %arg1[%c0_15, %30] : memref<1x512xf32, #tpu.memory_space<vmem>>, vector<1x128xf32>
    %32 = vector.broadcast %0 : vector<128x1xf32> to vector<128x128xf32>
    %33 = vector.broadcast %31 : vector<1x128xf32> to vector<128x128xf32>
    %34 = arith.mulf %32, %33 : vector<128x128xf32>
    %35 = vector.broadcast %1 : vector<128x1xf32> to vector<128x128xf32>
    %36 = arith.addf %34, %35 : vector<128x128xf32>
    %cst_16 = arith.constant 0.000000e+00 : f32
    %37 = vector.broadcast %cst_16 : f32 to vector<128x128xf32>
    %38 = arith.maximumf %36, %37 : vector<128x128xf32>
    %cst_17 = arith.constant dense<0.000000e+00> : vector<128x128xf32>
    %39 = tpu.matmul %3, %38, %cst_17 {dimension_numbers = #tpu.dot_dimension_numbers<[1], [0], [0], [1], [0, 0, 1, 1], [], []>} : vector<128x128xf32>, vector<128x128xf32>, vector<128x128xf32> -> vector<128x128xf32>
    %40 = vector.broadcast %2 : vector<128x1xf32> to vector<128x128xf32>
    %41 = arith.addf %39, %40 : vector<128x128xf32>
    %cst_18 = arith.constant 0.000000e+00 : f32
    %42 = vector.broadcast %cst_18 : f32 to vector<128x128xf32>
    %43 = arith.maximumf %41, %42 : vector<128x128xf32>
    %cst_19 = arith.constant dense<0.000000e+00> : vector<1x128xf32>
    %44 = tpu.matmul %4, %43, %cst_19 {dimension_numbers = #tpu.dot_dimension_numbers<[1], [0], [0], [1], [0, 0, 1, 1], [], []>} : vector<1x128xf32>, vector<128x128xf32>, vector<1x128xf32> -> vector<1x128xf32>
    %45 = vector.broadcast %5 : vector<1x1xf32> to vector<1x128xf32>
    %46 = arith.addf %44, %45 : vector<1x128xf32>
    %47 = math.tanh %46 : vector<1x128xf32>
    %c0_20 = arith.constant 0 : index
    %48 = arith.index_cast %29 : i32 to index
    %49 = vector.load %arg6[%c0_20, %48] : memref<1x512xf32, #tpu.memory_space<vmem>>, vector<1x128xf32>
    tpu.vector_store %arg6[%c0_20, %48], %47 {strides = array<i32>} : memref<1x512xf32, #tpu.memory_space<vmem>>, vector<1x128xf32>,
    %c2_i32 = arith.constant 2 : i32
    %c128_i32_21 = arith.constant 128 : i32
    %50 = arith.muli %c2_i32, %c128_i32_21 : i32
    %51 = tpu.assume_multiple %50, 128 : i32
    %c0_22 = arith.constant 0 : index
    %52 = arith.index_cast %51 : i32 to index
    %53 = vector.load %arg1[%c0_22, %52] : memref<1x512xf32, #tpu.memory_space<vmem>>, vector<1x128xf32>
    %54 = vector.broadcast %0 : vector<128x1xf32> to vector<128x128xf32>
    %55 = vector.broadcast %53 : vector<1x128xf32> to vector<128x128xf32>
    %56 = arith.mulf %54, %55 : vector<128x128xf32>
    %57 = vector.broadcast %1 : vector<128x1xf32> to vector<128x128xf32>
    %58 = arith.addf %56, %57 : vector<128x128xf32>
    %cst_23 = arith.constant 0.000000e+00 : f32
    %59 = vector.broadcast %cst_23 : f32 to vector<128x128xf32>
    %60 = arith.maximumf %58, %59 : vector<128x128xf32>
    %cst_24 = arith.constant dense<0.000000e+00> : vector<128x128xf32>
    %61 = tpu.matmul %3, %60, %cst_24 {dimension_numbers = #tpu.dot_dimension_numbers<[1], [0], [0], [1], [0, 0, 1, 1], [], []>} : vector<128x128xf32>, vector<128x128xf32>, vector<128x128xf32> -> vector<128x128xf32>
    %62 = vector.broadcast %2 : vector<128x1xf32> to vector<128x128xf32>
    %63 = arith.addf %61, %62 : vector<128x128xf32>
    %cst_25 = arith.constant 0.000000e+00 : f32
    %64 = vector.broadcast %cst_25 : f32 to vector<128x128xf32>
    %65 = arith.maximumf %63, %64 : vector<128x128xf32>
    %cst_26 = arith.constant dense<0.000000e+00> : vector<1x128xf32>
    %66 = tpu.matmul %4, %65, %cst_26 {dimension_numbers = #tpu.dot_dimension_numbers<[1], [0], [0], [1], [0, 0, 1, 1], [], []>} : vector<1x128xf32>, vector<128x128xf32>, vector<1x128xf32> -> vector<1x128xf32>
    %67 = vector.broadcast %5 : vector<1x1xf32> to vector<1x128xf32>
    %68 = arith.addf %66, %67 : vector<1x128xf32>
    %69 = math.tanh %68 : vector<1x128xf32>
    %c0_27 = arith.constant 0 : index
    %70 = arith.index_cast %51 : i32 to index
    %71 = vector.load %arg6[%c0_27, %70] : memref<1x512xf32, #tpu.memory_space<vmem>>, vector<1x128xf32>
    tpu.vector_store %arg6[%c0_27, %70], %69 {strides = array<i32>} : memref<1x512xf32, #tpu.memory_space<vmem>>, vector<1x128xf32>,
    %c3_i32 = arith.constant 3 : i32
    %c128_i32_28 = arith.constant 128 : i32
    %72 = arith.muli %c3_i32, %c128_i32_28 : i32
    %73 = tpu.assume_multiple %72, 128 : i32
    %c0_29 = arith.constant 0 : index
    %74 = arith.index_cast %73 : i32 to index
    %75 = vector.load %arg1[%c0_29, %74] : memref<1x512xf32, #tpu.memory_space<vmem>>, vector<1x128xf32>
    %76 = vector.broadcast %0 : vector<128x1xf32> to vector<128x128xf32>
    %77 = vector.broadcast %75 : vector<1x128xf32> to vector<128x128xf32>
    %78 = arith.mulf %76, %77 : vector<128x128xf32>
    %79 = vector.broadcast %1 : vector<128x1xf32> to vector<128x128xf32>
    %80 = arith.addf %78, %79 : vector<128x128xf32>
    %cst_30 = arith.constant 0.000000e+00 : f32
    %81 = vector.broadcast %cst_30 : f32 to vector<128x128xf32>
    %82 = arith.maximumf %80, %81 : vector<128x128xf32>
    %cst_31 = arith.constant dense<0.000000e+00> : vector<128x128xf32>
    %83 = tpu.matmul %3, %82, %cst_31 {dimension_numbers = #tpu.dot_dimension_numbers<[1], [0], [0], [1], [0, 0, 1, 1], [], []>} : vector<128x128xf32>, vector<128x128xf32>, vector<128x128xf32> -> vector<128x128xf32>
    %84 = vector.broadcast %2 : vector<128x1xf32> to vector<128x128xf32>
    %85 = arith.addf %83, %84 : vector<128x128xf32>
    %cst_32 = arith.constant 0.000000e+00 : f32
    %86 = vector.broadcast %cst_32 : f32 to vector<128x128xf32>
    %87 = arith.maximumf %85, %86 : vector<128x128xf32>
    %cst_33 = arith.constant dense<0.000000e+00> : vector<1x128xf32>
    %88 = tpu.matmul %4, %87, %cst_33 {dimension_numbers = #tpu.dot_dimension_numbers<[1], [0], [0], [1], [0, 0, 1, 1], [], []>} : vector<1x128xf32>, vector<128x128xf32>, vector<1x128xf32> -> vector<1x128xf32>
    %89 = vector.broadcast %5 : vector<1x1xf32> to vector<1x128xf32>
    %90 = arith.addf %88, %89 : vector<1x128xf32>
    %91 = math.tanh %90 : vector<1x128xf32>
    %c0_34 = arith.constant 0 : index
    %92 = arith.index_cast %73 : i32 to index
    %93 = vector.load %arg6[%c0_34, %92] : memref<1x512xf32, #tpu.memory_space<vmem>>, vector<1x128xf32>
    tpu.vector_store %arg6[%c0_34, %92], %91 {strides = array<i32>} : memref<1x512xf32, #tpu.memory_space<vmem>>, vector<1x128xf32>,
    %c4_i32 = arith.constant 4 : i32
    return
  }
  func.func @transform_0(%arg0: i32) -> (i32, i32) {
    %c0_i32 = arith.constant 0 : i32
    %c0_i32_0 = arith.constant 0 : i32
    return %c0_i32, %arg0 : i32, i32
  }
  func.func @transform_1(%arg0: i32) -> (i32, i32) {
    %c0_i32 = arith.constant 0 : i32
    %c0_i32_0 = arith.constant 0 : i32
    %c0_i32_1 = arith.constant 0 : i32
    return %c0_i32, %c0_i32_0 : i32, i32
  }
  func.func @transform_2(%arg0: i32) -> (i32, i32) {
    %c0_i32 = arith.constant 0 : i32
    %c0_i32_0 = arith.constant 0 : i32
    %c0_i32_1 = arith.constant 0 : i32
    return %c0_i32, %c0_i32_0 : i32, i32
  }
  func.func @transform_3(%arg0: i32) -> (i32, i32) {
    %c0_i32 = arith.constant 0 : i32
    %c0_i32_0 = arith.constant 0 : i32
    %c0_i32_1 = arith.constant 0 : i32
    return %c0_i32, %c0_i32_0 : i32, i32
  }
  func.func @transform_4(%arg0: i32) -> (i32, i32) {
    %c0_i32 = arith.constant 0 : i32
    %c0_i32_0 = arith.constant 0 : i32
    %c0_i32_1 = arith.constant 0 : i32
    return %c0_i32, %c0_i32_0 : i32, i32
  }
  func.func @transform_5(%arg0: i32) -> (i32, i32) {
    %c0_i32 = arith.constant 0 : i32
    %c0_i32_0 = arith.constant 0 : i32
    return %c0_i32, %arg0 : i32, i32
  }
}

</mosaic_0001>

<llo_original>
// kernel: tpu_custom_call.1
$region0: #{tpu_custom_call.1}
  #allocation0 [shape = 'u32[]', space=smem, size = 0x4, offset = 0x4, fixed_abs, tag = 'smem constant byte address 0x4 - core index']
  #allocation1 [shape = 'u32[144,128]{1,0:T(1,128)}', space=vmem, size = 0x12000, scoped, tag = 'internal scratch']
  #allocation2 [shape = 'f32[1,1]{1,0:T(1,128)S(1)}', space=vmem, size = 0x200, scoped, tag = 'scoped memory for tpu_custom_call.1']
  %s0 = inlined_call_operand.vmem [shape: f32[1,1024], index: 0, kind: input, shape index: {}]
  %s1 = inlined_call_operand.vmem [shape: f32[128,3], index: 1, kind: input, shape index: {}]
  %s2 = inlined_call_operand.vmem [shape: f32[128,128], index: 2, kind: input, shape index: {}]
  %s3 = inlined_call_operand.vmem [shape: f32[1,128], index: 3, kind: input, shape index: {}]
  %s4 = inlined_call_operand.<no memory space> [shape: f32[1,1], index: 4, kind: input, shape index: {}]
  %s5 = inlined_call_operand.hbm [shape: f32[1,1024], index: 5, kind: output, shape index: {}]
  %s6 = sld [smem:[#allocation0]]
  $region53: #{tpu_custom_call.1} parent=0
    _
  %s8 = ssub.s32 1, %s6
  %s9 = scalar_select 0, %s8, %s6
  %v10 = vstv %s4
  %11 = vst [vmem:[#allocation2] sm:$0x1] %v10
  $region1: #{tpu_custom_call.1} parent=0
    #allocation3 [shape = 'u8[4096]{0}', space=vmem, size = 0x1000, scoped, tag = 'output window, operand 0']
    #allocation4 [shape = 's32[2]{0}', space=sflag, size = 0x8, scoped, tag = 'scoped memory for tpu_custom_call.1']
    %12 = vsyncpa [#allocation4], 0
    %s13 = scalar_lea.sflag [#allocation4], 1
    %14 = vsyncpa %s13, 0
    loop: start=0, step=1, limit=4
    $region2: #{tpu_custom_call.1} parent=1 // loop_pre_header
      _
    $region3: #{tpu_custom_call.1} parent=1 // loop_header
      %s16 = sphi 0, %s20
      %p17 = scmp.ge.s32.totalorder %s16, 4
      %s26 = sphi 0, %s28
      %s29 = sphi 0, %s26
      %s30 = sphi 0, %s29
      %s46 = sphi 0, %s30
      %s50 = sphi 0, %s50
      %s52 = sphi 0, %s50
      %s53 = sphi 0, %s52
      %s67 = sphi 0, %s53
      %s71 = sphi 0, %s71
      %s73 = sphi 0, %s71
      %s74 = sphi 0, %s73
      %s88 = sphi 0, %s74
      %s92 = sphi 0, %s92
      %s94 = sphi 0, %s92
      %s95 = sphi 0, %s94
      %s109 = sphi 0, %s95
      %s113 = sphi 0, %s113
      %s115 = sphi 0, %s113
      %s116 = sphi 0, %s115
      %s130 = sphi 0, %s116
      %s136 = sphi 0, %s138
      %s139 = sphi 0, %s136
      %s140 = sphi 0, %s139
      %s156 = sphi 0, %s140
    $region4: #{tpu_custom_call.1} parent=1 // loop_header_branch
      %19 = sbr.rel (%p17) target = $region8
    $region5: #{tpu_custom_call.1} parent=1 // loop_body
      %s21 = ssub.s32 %s16, 1
      %s22 = ssub.s32 %s16, 2
      %s23 = sadd.s32 %s16, 1
      %s24 = ssub.s32 %s16, %s23
      %p25 = scmp.eq.s32.totalorder %s24, 0
      %s27 = sadd.s32 %s26, 1
      %s28 = scalar_select %p25, %s26, %s27
      %p31 = pneg %p25
      %p32 = scmp.eq.s32.totalorder %s16, 1
      %p33 = por %p31, %p32
      %p34 = scmp.ne.s32.totalorder %s26, %s29
      %p35 = scmp.eq.s32.totalorder %s16, 0
      %p36 = por %p34, %p35
      %p37 = scmp.ne.s32.totalorder %s26, %s29
      %p38 = scmp.eq.s32.totalorder %s21, 1
      %p39 = por %p37, %p38
      %p40 = scmp.ne.s32.totalorder %s29, %s30
      %p41 = scmp.eq.s32.totalorder %s21, 0
      %p42 = por %p40, %p41
      %p43 = scmp.ne.s32.totalorder %s29, %s30
      %p44 = scmp.eq.s32.totalorder %s22, 1
      %p45 = por %p43, %p44
      %p47 = scmp.ne.s32.totalorder %s30, %s46
      %p48 = scmp.eq.s32.totalorder %s22, 0
      %p49 = por %p47, %p48
      %s51 = sadd.s32 %s50, 1
      %p54 = scmp.eq.s32.totalorder %s16, 1
      %p55 = scmp.ne.s32.totalorder %s50, %s52
      %p56 = scmp.eq.s32.totalorder %s16, 0
      %p57 = por %p55, %p56
      %p58 = scmp.ne.s32.totalorder %s50, %s52
      %p59 = scmp.eq.s32.totalorder %s21, 1
      %p60 = por %p58, %p59
      %p61 = scmp.ne.s32.totalorder %s52, %s53
      %p62 = scmp.eq.s32.totalorder %s21, 0
      %p63 = por %p61, %p62
      %p64 = scmp.ne.s32.totalorder %s52, %s53
      %p65 = scmp.eq.s32.totalorder %s22, 1
      %p66 = por %p64, %p65
      %p68 = scmp.ne.s32.totalorder %s53, %s67
      %p69 = scmp.eq.s32.totalorder %s22, 0
      %p70 = por %p68, %p69
      %s72 = sadd.s32 %s71, 1
      %p75 = scmp.eq.s32.totalorder %s16, 1
      %p76 = scmp.ne.s32.totalorder %s71, %s73
      %p77 = scmp.eq.s32.totalorder %s16, 0
      %p78 = por %p76, %p77
      %p79 = scmp.ne.s32.totalorder %s71, %s73
      %p80 = scmp.eq.s32.totalorder %s21, 1
      %p81 = por %p79, %p80
      %p82 = scmp.ne.s32.totalorder %s73, %s74
      %p83 = scmp.eq.s32.totalorder %s21, 0
      %p84 = por %p82, %p83
      %p85 = scmp.ne.s32.totalorder %s73, %s74
      %p86 = scmp.eq.s32.totalorder %s22, 1
      %p87 = por %p85, %p86
      %p89 = scmp.ne.s32.totalorder %s74, %s88
      %p90 = scmp.eq.s32.totalorder %s22, 0
      %p91 = por %p89, %p90
      %s93 = sadd.s32 %s92, 1
      %p96 = scmp.eq.s32.totalorder %s16, 1
      %p97 = scmp.ne.s32.totalorder %s92, %s94
      %p98 = scmp.eq.s32.totalorder %s16, 0
      %p99 = por %p97, %p98
      %p100 = scmp.ne.s32.totalorder %s92, %s94
      %p101 = scmp.eq.s32.totalorder %s21, 1
      %p102 = por %p100, %p101
      %p103 = scmp.ne.s32.totalorder %s94, %s95
      %p104 = scmp.eq.s32.totalorder %s21, 0
      %p105 = por %p103, %p104
      %p106 = scmp.ne.s32.totalorder %s94, %s95
      %p107 = scmp.eq.s32.totalorder %s22, 1
      %p108 = por %p106, %p107
      %p110 = scmp.ne.s32.totalorder %s95, %s109
      %p111 = scmp.eq.s32.totalorder %s22, 0
      %p112 = por %p110, %p111
      %s114 = sadd.s32 %s113, 1
      %p117 = scmp.eq.s32.totalorder %s16, 1
      %p118 = scmp.ne.s32.totalorder %s113, %s115
      %p119 = scmp.eq.s32.totalorder %s16, 0
      %p120 = por %p118, %p119
      %p121 = scmp.ne.s32.totalorder %s113, %s115
      %p122 = scmp.eq.s32.totalorder %s21, 1
      %p123 = por %p121, %p122
      %p124 = scmp.ne.s32.totalorder %s115, %s116
      %p125 = scmp.eq.s32.totalorder %s21, 0
      %p126 = por %p124, %p125
      %p127 = scmp.ne.s32.totalorder %s115, %s116
      %p128 = scmp.eq.s32.totalorder %s22, 1
      %p129 = por %p127, %p128
      %p131 = scmp.ne.s32.totalorder %s116, %s130
      %p132 = scmp.eq.s32.totalorder %s22, 0
      %p133 = por %p131, %p132
      %s134 = ssub.s32 %s16, %s23
      %p135 = scmp.eq.s32.totalorder %s134, 0
      %s137 = sadd.s32 %s136, 1
      %s138 = scalar_select %p135, %s136, %s137
      %p141 = pneg %p135
      %p142 = scmp.eq.s32.totalorder %s16, 1
      %p143 = por %p141, %p142
      %p144 = scmp.ne.s32.totalorder %s136, %s139
      %p145 = scmp.eq.s32.totalorder %s16, 0
      %p146 = por %p144, %p145
      %p147 = scmp.ne.s32.totalorder %s136, %s139
      %p148 = scmp.eq.s32.totalorder %s21, 1
      %p149 = por %p147, %p148
      %p150 = scmp.ne.s32.totalorder %s139, %s140
      %p151 = scmp.eq.s32.totalorder %s21, 0
      %p152 = por %p150, %p151
      %p153 = scmp.ne.s32.totalorder %s139, %s140
      %p154 = scmp.eq.s32.totalorder %s22, 1
      %p155 = por %p153, %p154
      %p157 = scmp.ne.s32.totalorder %s140, %s156
      %p158 = scmp.eq.s32.totalorder %s22, 0
      %p159 = por %p157, %p158
      %p160 = scmp.le.s32.totalorder 1, %s16
      %p161 = scmp.lt.s32.totalorder %s16, 3
      %p162 = pnand %p160, %p161
      %p163 = pneg %p162
      // Predicated region
      $region9: #{tpu_custom_call.1} parent=5 // pred_check
        _
      $region10: #{tpu_custom_call.1} parent=5 // pred_check_branch
        %165 = sbr.rel (%p162) target = $region12
      $region11: #{tpu_custom_call.1} parent=5 // pred_region
        %s166 = ssub.s32 %s16, 1
        // Predicated region
        $region13: #{tpu_custom_call.1} parent=11 // pred_check
          %p167 = pneg %p63
        $region14: #{tpu_custom_call.1} parent=11 // pred_check_branch
          %169 = sbr.rel (%p167) target = $region16
        $region15: #{tpu_custom_call.1} parent=11 // pred_region
          _
        $region16: #{tpu_custom_call.1} parent=11 // pred_fallthru
          _
        // Predicated region
        $region17: #{tpu_custom_call.1} parent=11 // pred_check
          %p170 = pneg %p84
        $region18: #{tpu_custom_call.1} parent=11 // pred_check_branch
          %172 = sbr.rel (%p170) target = $region20
        $region19: #{tpu_custom_call.1} parent=11 // pred_region
          _
        $region20: #{tpu_custom_call.1} parent=11 // pred_fallthru
          _
        // Predicated region
        $region21: #{tpu_custom_call.1} parent=11 // pred_check
          %p173 = pneg %p105
        $region22: #{tpu_custom_call.1} parent=11 // pred_check_branch
          %175 = sbr.rel (%p173) target = $region24
        $region23: #{tpu_custom_call.1} parent=11 // pred_region
          _
        $region24: #{tpu_custom_call.1} parent=11 // pred_fallthru
          _
        // Predicated region
        $region25: #{tpu_custom_call.1} parent=11 // pred_check
          %p176 = pneg %p126
        $region26: #{tpu_custom_call.1} parent=11 // pred_check_branch
          %178 = sbr.rel (%p176) target = $region28
        $region27: #{tpu_custom_call.1} parent=11 // pred_region
          _
        $region28: #{tpu_custom_call.1} parent=11 // pred_fallthru
          _
      $region12: #{tpu_custom_call.1} parent=5 // pred_fallthru
        _
      %p179 = scmp.lt.s32.totalorder %s16, 2
      // Predicated region
      $region29: #{tpu_custom_call.1} parent=5 // pred_check
        %p180 = pneg %p179
      $region30: #{tpu_custom_call.1} parent=5 // pred_check_branch
        %182 = sbr.rel (%p180) target = $region32
      $region31: #{tpu_custom_call.1} parent=5 // pred_region
        // Predicated region
        $region33: #{tpu_custom_call.1} parent=31 // pred_check
          %p183 = pneg %p36
        $region34: #{tpu_custom_call.1} parent=31 // pred_check_branch
          %185 = sbr.rel (%p183) target = $region36
        $region35: #{tpu_custom_call.1} parent=31 // pred_region
          %s186 = smul.u32 4, %s16
          %p187 = scmp.lt.s32.totalorder %s186, 7
          %s188 = scalar_select %p187, %s186, 7
          %s189 = scalar_lea.vmem %s0, %s188
          %s190 = smul.u32 4, %s16
        $region36: #{tpu_custom_call.1} parent=31 // pred_fallthru
          _
      $region32: #{tpu_custom_call.1} parent=5 // pred_fallthru
        _
      %p191 = scmp.le.s32.totalorder 1, %s16
      %p192 = scmp.lt.s32.totalorder %s16, 3
      %p193 = pnand %p191, %p192
      %p194 = pneg %p193
      // Predicated region
      $region37: #{tpu_custom_call.1} parent=5 // pred_check
        _
      $region38: #{tpu_custom_call.1} parent=5 // pred_check_branch
        %196 = sbr.rel (%p193) target = $region40
      $region39: #{tpu_custom_call.1} parent=5 // pred_region
        %s197 = ssub.s32 %s16, 1
        %s198 = smul.u32 4, %s21
        %p199 = scmp.lt.s32.totalorder %s198, 7
        %s200 = scalar_select %p199, %s198, 7
        %s201 = scalar_lea.vmem %s0, %s200
        %p202 = pneg %p42
        %p203 = pneg %p39
        %p204 = pneg %p63
        %p205 = pneg %p60
        %p206 = pneg %p84
        %p207 = pneg %p81
        %p208 = pneg %p105
        %p209 = pneg %p102
        %p210 = pneg %p126
        %p211 = pneg %p123
        %p212 = pneg %p152
        %p213 = pneg %p149
        %s214 = sand.u32 %s139, 1
        %s215 = scalar_lea.sflag [#allocation4], %s214
        %s216 = sand.u32 %s139, 1
        %s217 = smul.addr %s216, 4
        %s218 = scalar_lea.vmem [#allocation3], %s217
        %s219 = smul.u32 4, %s21
        %p220 = scmp.lt.s32.totalorder %s219, 7
        %s221 = scalar_select %p220, %s219, 7
        %s222 = scalar_lea.vmem %s0, %s221
        %s223 = smul.u32 4, %s21
        %s224 = smul.u32 4, %s21
        %v225 = vld [vmem:[%s1] sm:$0xff]
        %v226 = vld [vmem:[%s1 + $0x8] sm:$0xff]
        %v227 = vld [vmem:[%s1 + $0x10] sm:$0xff]
        %v228 = vld [vmem:[%s1 + $0x18] sm:$0xff]
        %v229 = vld [vmem:[%s1 + $0x20] sm:$0xff]
        %v230 = vld [vmem:[%s1 + $0x28] sm:$0xff]
        %v231 = vld [vmem:[%s1 + $0x30] sm:$0xff]
        %v232 = vld [vmem:[%s1 + $0x38] sm:$0xff]
        %v233 = vld [vmem:[%s1 + $0x40] sm:$0xff]
        %v234 = vld [vmem:[%s1 + $0x48] sm:$0xff]
        %v235 = vld [vmem:[%s1 + $0x50] sm:$0xff]
        %v236 = vld [vmem:[%s1 + $0x58] sm:$0xff]
        %v237 = vld [vmem:[%s1 + $0x60] sm:$0xff]
        %v238 = vld [vmem:[%s1 + $0x68] sm:$0xff]
        %v239 = vld [vmem:[%s1 + $0x70] sm:$0xff]
        %v240 = vld [vmem:[%s1 + $0x78] sm:$0xff]
        %v241 = vld [vmem:[%s2] sm:$0xff]
        %v242 = vld [vmem:[%s2 + $0x8] sm:$0xff]
        %v243 = vld [vmem:[%s2 + $0x10] sm:$0xff]
        %v244 = vld [vmem:[%s2 + $0x18] sm:$0xff]
        %v245 = vld [vmem:[%s2 + $0x20] sm:$0xff]
        %v246 = vld [vmem:[%s2 + $0x28] sm:$0xff]
        %v247 = vld [vmem:[%s2 + $0x30] sm:$0xff]
        %v248 = vld [vmem:[%s2 + $0x38] sm:$0xff]
        %v249 = vld [vmem:[%s2 + $0x40] sm:$0xff]
        %v250 = vld [vmem:[%s2 + $0x48] sm:$0xff]
        %v251 = vld [vmem:[%s2 + $0x50] sm:$0xff]
        %v252 = vld [vmem:[%s2 + $0x58] sm:$0xff]
        %v253 = vld [vmem:[%s2 + $0x60] sm:$0xff]
        %v254 = vld [vmem:[%s2 + $0x68] sm:$0xff]
        %v255 = vld [vmem:[%s2 + $0x70] sm:$0xff]
        %v256 = vld [vmem:[%s2 + $0x78] sm:$0xff]
        %v257 = vld [vmem:[%s3] sm:$0x1]
        %v258 = vld [vmem:[#allocation2] sm:$0x1]
        %v259 = vld [vmem:[%s222] sm:$0x1]
        %261 = vset.pattern.permute.xlu0 0
        %262 = vperm.xlu0 %261, %v225
        %v263 = vpop.permute.xlu0 %262
        %266 = vset.pattern.permute.xlu0 0
        %267 = vperm.xlu0 %266, %v226
        %v268 = vpop.permute.xlu0 %267
        %271 = vset.pattern.permute.xlu0 0
        %272 = vperm.xlu0 %271, %v227
        %v273 = vpop.permute.xlu0 %272
        %276 = vset.pattern.permute.xlu0 0
        %277 = vperm.xlu0 %276, %v228
        %v278 = vpop.permute.xlu0 %277
        %281 = vset.pattern.permute.xlu0 0
        %282 = vperm.xlu0 %281, %v229
        %v283 = vpop.permute.xlu0 %282
        %286 = vset.pattern.permute.xlu0 0
        %287 = vperm.xlu0 %286, %v230
        %v288 = vpop.permute.xlu0 %287
        %291 = vset.pattern.permute.xlu0 0
        %292 = vperm.xlu0 %291, %v231
        %v293 = vpop.permute.xlu0 %292
        %296 = vset.pattern.permute.xlu0 0
        %297 = vperm.xlu0 %296, %v232
        %v298 = vpop.permute.xlu0 %297
        %301 = vset.pattern.permute.xlu0 0
        %302 = vperm.xlu0 %301, %v233
        %v303 = vpop.permute.xlu0 %302
        %306 = vset.pattern.permute.xlu0 0
        %307 = vperm.xlu0 %306, %v234
        %v308 = vpop.permute.xlu0 %307
        %311 = vset.pattern.permute.xlu0 0
        %312 = vperm.xlu0 %311, %v235
        %v313 = vpop.permute.xlu0 %312
        %316 = vset.pattern.permute.xlu0 0
        %317 = vperm.xlu0 %316, %v236
        %v318 = vpop.permute.xlu0 %317
        %321 = vset.pattern.permute.xlu0 0
        %322 = vperm.xlu0 %321, %v237
        %v323 = vpop.permute.xlu0 %322
        %326 = vset.pattern.permute.xlu0 0
        %327 = vperm.xlu0 %326, %v238
        %v328 = vpop.permute.xlu0 %327
        %331 = vset.pattern.permute.xlu0 0
        %332 = vperm.xlu0 %331, %v239
        %v333 = vpop.permute.xlu0 %332
        %336 = vset.pattern.permute.xlu0 0
        %337 = vperm.xlu0 %336, %v240
        %v338 = vpop.permute.xlu0 %337
        %v341 = vlaneseq
        %v342 = vshrl.u32 %v341, 7
        %v343 = vsub.s32 0, %v342
        %v344 = vrot.slane %v259, %v343
        %v346 = vmul.f32 %v263, %v344
        %v347 = vmul.f32 %v268, %v344
        %v348 = vmul.f32 %v273, %v344
        %v349 = vmul.f32 %v278, %v344
        %v350 = vmul.f32 %v283, %v344
        %v351 = vmul.f32 %v288, %v344
        %v352 = vmul.f32 %v293, %v344
        %v353 = vmul.f32 %v298, %v344
        %v354 = vmul.f32 %v303, %v344
        %v355 = vmul.f32 %v308, %v344
        %v356 = vmul.f32 %v313, %v344
        %v357 = vmul.f32 %v318, %v344
        %v358 = vmul.f32 %v323, %v344
        %v359 = vmul.f32 %v328, %v344
        %v360 = vmul.f32 %v333, %v344
        %v361 = vmul.f32 %v338, %v344
        %362 = vset.pattern.permute.xlu0 1
        %363 = vperm.xlu0 %362, %v225
        %v364 = vpop.permute.xlu0 %363
        %366 = vset.pattern.permute.xlu0 1
        %367 = vperm.xlu0 %366, %v226
        %v368 = vpop.permute.xlu0 %367
        %370 = vset.pattern.permute.xlu0 1
        %371 = vperm.xlu0 %370, %v227
        %v372 = vpop.permute.xlu0 %371
        %374 = vset.pattern.permute.xlu0 1
        %375 = vperm.xlu0 %374, %v228
        %v376 = vpop.permute.xlu0 %375
        %378 = vset.pattern.permute.xlu0 1
        %379 = vperm.xlu0 %378, %v229
        %v380 = vpop.permute.xlu0 %379
        %382 = vset.pattern.permute.xlu0 1
        %383 = vperm.xlu0 %382, %v230
        %v384 = vpop.permute.xlu0 %383
        %386 = vset.pattern.permute.xlu0 1
        %387 = vperm.xlu0 %386, %v231
        %v388 = vpop.permute.xlu0 %387
        %390 = vset.pattern.permute.xlu0 1
        %391 = vperm.xlu0 %390, %v232
        %v392 = vpop.permute.xlu0 %391
        %394 = vset.pattern.permute.xlu0 1
        %395 = vperm.xlu0 %394, %v233
        %v396 = vpop.permute.xlu0 %395
        %398 = vset.pattern.permute.xlu0 1
        %399 = vperm.xlu0 %398, %v234
        %v400 = vpop.permute.xlu0 %399
        %402 = vset.pattern.permute.xlu0 1
        %403 = vperm.xlu0 %402, %v235
        %v404 = vpop.permute.xlu0 %403
        %406 = vset.pattern.permute.xlu0 1
        %407 = vperm.xlu0 %406, %v236
        %v408 = vpop.permute.xlu0 %407
        %410 = vset.pattern.permute.xlu0 1
        %411 = vperm.xlu0 %410, %v237
        %v412 = vpop.permute.xlu0 %411
        %414 = vset.pattern.permute.xlu0 1
        %415 = vperm.xlu0 %414, %v238
        %v416 = vpop.permute.xlu0 %415
        %418 = vset.pattern.permute.xlu0 1
        %419 = vperm.xlu0 %418, %v239
        %v420 = vpop.permute.xlu0 %419
        %422 = vset.pattern.permute.xlu0 1
        %423 = vperm.xlu0 %422, %v240
        %v424 = vpop.permute.xlu0 %423
        %v426 = vadd.f32 %v346, %v364
        %v427 = vadd.f32 %v347, %v368
        %v428 = vadd.f32 %v348, %v372
        %v429 = vadd.f32 %v349, %v376
        %v430 = vadd.f32 %v350, %v380
        %v431 = vadd.f32 %v351, %v384
        %v432 = vadd.f32 %v352, %v388
        %v433 = vadd.f32 %v353, %v392
        %v434 = vadd.f32 %v354, %v396
        %v435 = vadd.f32 %v355, %v400
        %v436 = vadd.f32 %v356, %v404
        %v437 = vadd.f32 %v357, %v408
        %v438 = vadd.f32 %v358, %v412
        %v439 = vadd.f32 %v359, %v416
        %v440 = vadd.f32 %v360, %v420
        %v441 = vadd.f32 %v361, %v424
        %v442 = vmax.f32 %v426, 0.0
        %v443 = vmax.f32 %v427, 0.0
        %v444 = vmax.f32 %v428, 0.0
        %v445 = vmax.f32 %v429, 0.0
        %v446 = vmax.f32 %v430, 0.0
        %v447 = vmax.f32 %v431, 0.0
        %v448 = vmax.f32 %v432, 0.0
        %v449 = vmax.f32 %v433, 0.0
        %v450 = vmax.f32 %v434, 0.0
        %v451 = vmax.f32 %v435, 0.0
        %v452 = vmax.f32 %v436, 0.0
        %v453 = vmax.f32 %v437, 0.0
        %v454 = vmax.f32 %v438, 0.0
        %v455 = vmax.f32 %v439, 0.0
        %v456 = vmax.f32 %v440, 0.0
        %v457 = vmax.f32 %v441, 0.0
        %458 = vset.pattern.permute.xlu0 2
        %459 = vperm.xlu0 %458, %v225
        %v460 = vpop.permute.xlu0 %459
        %462 = vset.pattern.permute.xlu0 2
        %463 = vperm.xlu0 %462, %v226
        %v464 = vpop.permute.xlu0 %463
        %466 = vset.pattern.permute.xlu0 2
        %467 = vperm.xlu0 %466, %v227
        %v468 = vpop.permute.xlu0 %467
        %470 = vset.pattern.permute.xlu0 2
        %471 = vperm.xlu0 %470, %v228
        %v472 = vpop.permute.xlu0 %471
        %474 = vset.pattern.permute.xlu0 2
        %475 = vperm.xlu0 %474, %v229
        %v476 = vpop.permute.xlu0 %475
        %478 = vset.pattern.permute.xlu0 2
        %479 = vperm.xlu0 %478, %v230
        %v480 = vpop.permute.xlu0 %479
        %482 = vset.pattern.permute.xlu0 2
        %483 = vperm.xlu0 %482, %v231
        %v484 = vpop.permute.xlu0 %483
        %486 = vset.pattern.permute.xlu0 2
        %487 = vperm.xlu0 %486, %v232
        %v488 = vpop.permute.xlu0 %487
        %490 = vset.pattern.permute.xlu0 2
        %491 = vperm.xlu0 %490, %v233
        %v492 = vpop.permute.xlu0 %491
        %494 = vset.pattern.permute.xlu0 2
        %495 = vperm.xlu0 %494, %v234
        %v496 = vpop.permute.xlu0 %495
        %498 = vset.pattern.permute.xlu0 2
        %499 = vperm.xlu0 %498, %v235
        %v500 = vpop.permute.xlu0 %499
        %502 = vset.pattern.permute.xlu0 2
        %503 = vperm.xlu0 %502, %v236
        %v504 = vpop.permute.xlu0 %503
        %506 = vset.pattern.permute.xlu0 2
        %507 = vperm.xlu0 %506, %v237
        %v508 = vpop.permute.xlu0 %507
        %510 = vset.pattern.permute.xlu0 2
        %511 = vperm.xlu0 %510, %v238
        %v512 = vpop.permute.xlu0 %511
        %514 = vset.pattern.permute.xlu0 2
        %515 = vperm.xlu0 %514, %v239
        %v516 = vpop.permute.xlu0 %515
        %518 = vset.pattern.permute.xlu0 2
        %519 = vperm.xlu0 %518, %v240
        %v520 = vpop.permute.xlu0 %519
        %522 = vmatprep.subr.mxu0 0.0
        %523 = vmatpush1.msra.mxu0 %v457
        %524 = vmatprep.subr.mxu0 0.0
        %525 = vmatpush1.msra.mxu0 %v456
        %526 = vmatprep.subr.mxu0 0.0
        %527 = vmatpush1.msra.mxu0 %v455
        %528 = vmatprep.subr.mxu0 0.0
        %529 = vmatpush1.msra.mxu0 %v454
        %530 = vmatprep.subr.mxu0 0.0
        %531 = vmatpush1.msra.mxu0 %v453
        %532 = vmatprep.subr.mxu0 0.0
        %533 = vmatpush1.msra.mxu0 %v452
        %534 = vmatprep.subr.mxu0 0.0
        %535 = vmatpush1.msra.mxu0 %v451
        %536 = vmatprep.subr.mxu0 0.0
        %537 = vmatpush1.msra.mxu0 %v450
        %538 = vmatprep.subr.mxu0 0.0
        %539 = vmatpush1.msra.mxu0 %v449
        %540 = vmatprep.subr.mxu0 0.0
        %541 = vmatpush1.msra.mxu0 %v448
        %542 = vmatprep.subr.mxu0 0.0
        %543 = vmatpush1.msra.mxu0 %v447
        %544 = vmatprep.subr.mxu0 0.0
        %545 = vmatpush1.msra.mxu0 %v446
        %546 = vmatprep.subr.mxu0 0.0
        %547 = vmatpush1.msra.mxu0 %v445
        %548 = vmatprep.subr.mxu0 0.0
        %549 = vmatpush1.msra.mxu0 %v444
        %550 = vmatprep.subr.mxu0 0.0
        %551 = vmatpush1.msra.mxu0 %v443
        %552 = vmatprep.subr.mxu0 0.0
        %553 = vmatpush1.msra.mxu0 %v442
        %554 = vmatprep.subr.mxu0 0.0
        %555 = vmatpush2.msra.mxu0 0.0
        %556 = vmatprep.subr.mxu0 0.0
        %557 = vmatpush2.msra.mxu0 0.0
        %558 = vmatprep.subr.mxu0 0.0
        %559 = vmatpush2.msra.mxu0 0.0
        %560 = vmatprep.subr.mxu0 0.0
        %561 = vmatpush2.msra.mxu0 0.0
        %562 = vmatprep.subr.mxu0 0.0
        %563 = vmatpush2.msra.mxu0 0.0
        %564 = vmatprep.subr.mxu0 0.0
        %565 = vmatpush2.msra.mxu0 0.0
        %566 = vmatprep.subr.mxu0 0.0
        %567 = vmatpush2.msra.mxu0 0.0
        %568 = vmatprep.subr.mxu0 0.0
        %569 = vmatpush2.msra.mxu0 0.0
        %570 = vmatprep.subr.mxu0 0.0
        %571 = vmatpush2.msra.mxu0 0.0
        %572 = vmatprep.subr.mxu0 0.0
        %573 = vmatpush2.msra.mxu0 0.0
        %574 = vmatprep.subr.mxu0 0.0
        %575 = vmatpush2.msra.mxu0 0.0
        %576 = vmatprep.subr.mxu0 0.0
        %577 = vmatpush2.msra.mxu0 0.0
        %578 = vmatprep.subr.mxu0 0.0
        %579 = vmatpush2.msra.mxu0 0.0
        %580 = vmatprep.subr.mxu0 0.0
        %581 = vmatpush2.msra.mxu0 0.0
        %582 = vmatprep.subr.mxu0 0.0
        %583 = vmatpush2.msra.mxu0 0.0
        %584 = vmatprep.subr.mxu0 0.0
        %585 = vmatpush2.msra.mxu0 0.0
        %586 = vmatprep.mubr.f32.mxu0 0.0
        %587 = vmatmul.mubr.f32.gmra.mxu0 %v241
        %v588 = vpop.f32.mrf.mxu0
        %v589 = vadd.f32 %v460, %v588
        %v590 = vpop.f32.mrf.mxu0
        %591 = vmatprep.mubr.f32.mxu0 0.0
        %592 = vmatmul.mubr.f32.gmra.mxu0 %v242
        %v593 = vpop.f32.mrf.mxu0
        %v594 = vadd.f32 %v464, %v593
        %v595 = vpop.f32.mrf.mxu0
        %596 = vmatprep.mubr.f32.mxu0 0.0
        %597 = vmatmul.mubr.f32.gmra.mxu0 %v243
        %v598 = vpop.f32.mrf.mxu0
        %v599 = vadd.f32 %v468, %v598
        %v600 = vpop.f32.mrf.mxu0
        %601 = vmatprep.mubr.f32.mxu0 0.0
        %602 = vmatmul.mubr.f32.gmra.mxu0 %v244
        %v603 = vpop.f32.mrf.mxu0
        %v604 = vadd.f32 %v472, %v603
        %v605 = vpop.f32.mrf.mxu0
        %606 = vmatprep.mubr.f32.mxu0 0.0
        %607 = vmatmul.mubr.f32.gmra.mxu0 %v245
        %v608 = vpop.f32.mrf.mxu0
        %v609 = vadd.f32 %v476, %v608
        %v610 = vpop.f32.mrf.mxu0
        %611 = vmatprep.mubr.f32.mxu0 0.0
        %612 = vmatmul.mubr.f32.gmra.mxu0 %v246
        %v613 = vpop.f32.mrf.mxu0
        %v614 = vadd.f32 %v480, %v613
        %v615 = vpop.f32.mrf.mxu0
        %616 = vmatprep.mubr.f32.mxu0 0.0
        %617 = vmatmul.mubr.f32.gmra.mxu0 %v247
        %v618 = vpop.f32.mrf.mxu0
        %v619 = vadd.f32 %v484, %v618
        %v620 = vpop.f32.mrf.mxu0
        %621 = vmatprep.mubr.f32.mxu0 0.0
        %622 = vmatmul.mubr.f32.gmra.mxu0 %v248
        %v623 = vpop.f32.mrf.mxu0
        %v624 = vadd.f32 %v488, %v623
        %v625 = vpop.f32.mrf.mxu0
        %626 = vmatprep.mubr.f32.mxu0 0.0
        %627 = vmatmul.mubr.f32.gmra.mxu0 %v249
        %v628 = vpop.f32.mrf.mxu0
        %v629 = vadd.f32 %v492, %v628
        %v630 = vpop.f32.mrf.mxu0
        %631 = vmatprep.mubr.f32.mxu0 0.0
        %632 = vmatmul.mubr.f32.gmra.mxu0 %v250
        %v633 = vpop.f32.mrf.mxu0
        %v634 = vadd.f32 %v496, %v633
        %v635 = vpop.f32.mrf.mxu0
        %636 = vmatprep.mubr.f32.mxu0 0.0
        %637 = vmatmul.mubr.f32.gmra.mxu0 %v251
        %v638 = vpop.f32.mrf.mxu0
        %v639 = vadd.f32 %v500, %v638
        %v640 = vpop.f32.mrf.mxu0
        %641 = vmatprep.mubr.f32.mxu0 0.0
        %642 = vmatmul.mubr.f32.gmra.mxu0 %v252
        %v643 = vpop.f32.mrf.mxu0
        %v644 = vadd.f32 %v504, %v643
        %v645 = vpop.f32.mrf.mxu0
        %646 = vmatprep.mubr.f32.mxu0 0.0
        %647 = vmatmul.mubr.f32.gmra.mxu0 %v253
        %v648 = vpop.f32.mrf.mxu0
        %v649 = vadd.f32 %v508, %v648
        %v650 = vpop.f32.mrf.mxu0
        %651 = vmatprep.mubr.f32.mxu0 0.0
        %652 = vmatmul.mubr.f32.gmra.mxu0 %v254
        %v653 = vpop.f32.mrf.mxu0
        %v654 = vadd.f32 %v512, %v653
        %v655 = vpop.f32.mrf.mxu0
        %656 = vmatprep.mubr.f32.mxu0 0.0
        %657 = vmatmul.mubr.f32.gmra.mxu0 %v255
        %v658 = vpop.f32.mrf.mxu0
        %v659 = vadd.f32 %v516, %v658
        %v660 = vpop.f32.mrf.mxu0
        %661 = vmatprep.mubr.f32.mxu0 0.0
        %662 = vmatmul.mubr.f32.gmra.mxu0 %v256
        %v663 = vpop.f32.mrf.mxu0
        %v664 = vadd.f32 %v520, %v663
        %v665 = vpop.f32.mrf.mxu0
        %666 = vdwg.mxu0
        %v667 = vmax.f32 %v589, 0.0
        %v668 = vmax.f32 %v594, 0.0
        %v669 = vmax.f32 %v599, 0.0
        %v670 = vmax.f32 %v604, 0.0
        %v671 = vmax.f32 %v609, 0.0
        %v672 = vmax.f32 %v614, 0.0
        %v673 = vmax.f32 %v619, 0.0
        %v674 = vmax.f32 %v624, 0.0
        %v675 = vmax.f32 %v629, 0.0
        %v676 = vmax.f32 %v634, 0.0
        %v677 = vmax.f32 %v639, 0.0
        %v678 = vmax.f32 %v644, 0.0
        %v679 = vmax.f32 %v649, 0.0
        %v680 = vmax.f32 %v654, 0.0
        %v681 = vmax.f32 %v659, 0.0
        %v682 = vmax.f32 %v664, 0.0
        %684 = vset.pattern.permute.xlu0 0
        %685 = vperm.xlu0 %684, %v258
        %v686 = vpop.permute.xlu0 %685
        %v688 = vlaneseq
        %v689 = vshrl.u32 %v688, 7
        %v690 = vsub.s32 0, %v689
        %v691 = vrot.slane %v686, %v690
        %692 = vmatprep.subr.mxu0 0.0
        %693 = vmatpush1.msra.mxu0 %v682
        %694 = vmatprep.subr.mxu0 0.0
        %695 = vmatpush1.msra.mxu0 %v681
        %696 = vmatprep.subr.mxu0 0.0
        %697 = vmatpush1.msra.mxu0 %v680
        %698 = vmatprep.subr.mxu0 0.0
        %699 = vmatpush1.msra.mxu0 %v679
        %700 = vmatprep.subr.mxu0 0.0
        %701 = vmatpush1.msra.mxu0 %v678
        %702 = vmatprep.subr.mxu0 0.0
        %703 = vmatpush1.msra.mxu0 %v677
        %704 = vmatprep.subr.mxu0 0.0
        %705 = vmatpush1.msra.mxu0 %v676
        %706 = vmatprep.subr.mxu0 0.0
        %707 = vmatpush1.msra.mxu0 %v675
        %708 = vmatprep.subr.mxu0 0.0
        %709 = vmatpush1.msra.mxu0 %v674
        %710 = vmatprep.subr.mxu0 0.0
        %711 = vmatpush1.msra.mxu0 %v673
        %712 = vmatprep.subr.mxu0 0.0
        %713 = vmatpush1.msra.mxu0 %v672
        %714 = vmatprep.subr.mxu0 0.0
        %715 = vmatpush1.msra.mxu0 %v671
        %716 = vmatprep.subr.mxu0 0.0
        %717 = vmatpush1.msra.mxu0 %v670
        %718 = vmatprep.subr.mxu0 0.0
        %719 = vmatpush1.msra.mxu0 %v669
        %720 = vmatprep.subr.mxu0 0.0
        %721 = vmatpush1.msra.mxu0 %v668
        %722 = vmatprep.subr.mxu0 0.0
        %723 = vmatpush1.msra.mxu0 %v667
        %724 = vmatprep.subr.mxu0 0.0
        %725 = vmatpush2.msra.mxu0 0.0
        %726 = vmatprep.subr.mxu0 0.0
        %727 = vmatpush2.msra.mxu0 0.0
        %728 = vmatprep.subr.mxu0 0.0
        %729 = vmatpush2.msra.mxu0 0.0
        %730 = vmatprep.subr.mxu0 0.0
        %731 = vmatpush2.msra.mxu0 0.0
        %732 = vmatprep.subr.mxu0 0.0
        %733 = vmatpush2.msra.mxu0 0.0
        %734 = vmatprep.subr.mxu0 0.0
        %735 = vmatpush2.msra.mxu0 0.0
        %736 = vmatprep.subr.mxu0 0.0
        %737 = vmatpush2.msra.mxu0 0.0
        %738 = vmatprep.subr.mxu0 0.0
        %739 = vmatpush2.msra.mxu0 0.0
        %740 = vmatprep.subr.mxu0 0.0
        %741 = vmatpush2.msra.mxu0 0.0
        %742 = vmatprep.subr.mxu0 0.0
        %743 = vmatpush2.msra.mxu0 0.0
        %744 = vmatprep.subr.mxu0 0.0
        %745 = vmatpush2.msra.mxu0 0.0
        %746 = vmatprep.subr.mxu0 0.0
        %747 = vmatpush2.msra.mxu0 0.0
        %748 = vmatprep.subr.mxu0 0.0
        %749 = vmatpush2.msra.mxu0 0.0
        %750 = vmatprep.subr.mxu0 0.0
        %751 = vmatpush2.msra.mxu0 0.0
        %752 = vmatprep.subr.mxu0 0.0
        %753 = vmatpush2.msra.mxu0 0.0
        %754 = vmatprep.subr.mxu0 0.0
        %755 = vmatpush2.msra.mxu0 0.0
        %756 = vmatprep.mubr.f32.mxu0 0.0
        %757 = vmatmul.mubr.f32.gmra.mxu0 %v257
        %v758 = vpop.f32.mrf.mxu0
        %v759 = vadd.f32 %v691, %v758
        %v760 = vpop.f32.mrf.mxu0
        %761 = vdwg.mxu0
        %v762 = vtanh.pop %v759
        %v763 = vlaneseq
        %vm764 = vcmp.ge.s32.totalorder %v763, 0
        %vm765 = vcmp.lt.s32.totalorder %v763, 128
        %vm766 = vmand %vm764, %vm765
        %767 = vst.msk [vmem:[%s218] sm:$0x1] %vm766, %v762
        %s768 = scalar_lea.vmem %s222, 1
        %v769 = vld [vmem:[%s768] sm:$0x1]
        %v771 = vlaneseq
        %v772 = vshrl.u32 %v771, 7
        %v773 = vsub.s32 0, %v772
        %v774 = vrot.slane %v769, %v773
        %v776 = vmul.f32 %v263, %v774
        %v777 = vmul.f32 %v268, %v774
        %v778 = vmul.f32 %v273, %v774
        %v779 = vmul.f32 %v278, %v774
        %v780 = vmul.f32 %v283, %v774
        %v781 = vmul.f32 %v288, %v774
        %v782 = vmul.f32 %v293, %v774
        %v783 = vmul.f32 %v298, %v774
        %v784 = vmul.f32 %v303, %v774
        %v785 = vmul.f32 %v308, %v774
        %v786 = vmul.f32 %v313, %v774
        %v787 = vmul.f32 %v318, %v774
        %v788 = vmul.f32 %v323, %v774
        %v789 = vmul.f32 %v328, %v774
        %v790 = vmul.f32 %v333, %v774
        %v791 = vmul.f32 %v338, %v774
        %v792 = vadd.f32 %v776, %v364
        %v793 = vadd.f32 %v777, %v368
        %v794 = vadd.f32 %v778, %v372
        %v795 = vadd.f32 %v779, %v376
        %v796 = vadd.f32 %v780, %v380
        %v797 = vadd.f32 %v781, %v384
        %v798 = vadd.f32 %v782, %v388
        %v799 = vadd.f32 %v783, %v392
        %v800 = vadd.f32 %v784, %v396
        %v801 = vadd.f32 %v785, %v400
        %v802 = vadd.f32 %v786, %v404
        %v803 = vadd.f32 %v787, %v408
        %v804 = vadd.f32 %v788, %v412
        %v805 = vadd.f32 %v789, %v416
        %v806 = vadd.f32 %v790, %v420
        %v807 = vadd.f32 %v791, %v424
        %v808 = vmax.f32 %v792, 0.0
        %v809 = vmax.f32 %v793, 0.0
        %v810 = vmax.f32 %v794, 0.0
        %v811 = vmax.f32 %v795, 0.0
        %v812 = vmax.f32 %v796, 0.0
        %v813 = vmax.f32 %v797, 0.0
        %v814 = vmax.f32 %v798, 0.0
        %v815 = vmax.f32 %v799, 0.0
        %v816 = vmax.f32 %v800, 0.0
        %v817 = vmax.f32 %v801, 0.0
        %v818 = vmax.f32 %v802, 0.0
        %v819 = vmax.f32 %v803, 0.0
        %v820 = vmax.f32 %v804, 0.0
        %v821 = vmax.f32 %v805, 0.0
        %v822 = vmax.f32 %v806, 0.0
        %v823 = vmax.f32 %v807, 0.0
        %824 = vmatprep.subr.mxu0 0.0
        %825 = vmatpush1.msra.mxu0 %v823
        %826 = vmatprep.subr.mxu0 0.0
        %827 = vmatpush1.msra.mxu0 %v822
        %828 = vmatprep.subr.mxu0 0.0
        %829 = vmatpush1.msra.mxu0 %v821
        %830 = vmatprep.subr.mxu0 0.0
        %831 = vmatpush1.msra.mxu0 %v820
        %832 = vmatprep.subr.mxu0 0.0
        %833 = vmatpush1.msra.mxu0 %v819
        %834 = vmatprep.subr.mxu0 0.0
        %835 = vmatpush1.msra.mxu0 %v818
        %836 = vmatprep.subr.mxu0 0.0
        %837 = vmatpush1.msra.mxu0 %v817
        %838 = vmatprep.subr.mxu0 0.0
        %839 = vmatpush1.msra.mxu0 %v816
        %840 = vmatprep.subr.mxu0 0.0
        %841 = vmatpush1.msra.mxu0 %v815
        %842 = vmatprep.subr.mxu0 0.0
        %843 = vmatpush1.msra.mxu0 %v814
        %844 = vmatprep.subr.mxu0 0.0
        %845 = vmatpush1.msra.mxu0 %v813
        %846 = vmatprep.subr.mxu0 0.0
        %847 = vmatpush1.msra.mxu0 %v812
        %848 = vmatprep.subr.mxu0 0.0
        %849 = vmatpush1.msra.mxu0 %v811
        %850 = vmatprep.subr.mxu0 0.0
        %851 = vmatpush1.msra.mxu0 %v810
        %852 = vmatprep.subr.mxu0 0.0
        %853 = vmatpush1.msra.mxu0 %v809
        %854 = vmatprep.subr.mxu0 0.0
        %855 = vmatpush1.msra.mxu0 %v808
        %856 = vmatprep.subr.mxu0 0.0
        %857 = vmatpush2.msra.mxu0 0.0
        %858 = vmatprep.subr.mxu0 0.0
        %859 = vmatpush2.msra.mxu0 0.0
        %860 = vmatprep.subr.mxu0 0.0
        %861 = vmatpush2.msra.mxu0 0.0
        %862 = vmatprep.subr.mxu0 0.0
        %863 = vmatpush2.msra.mxu0 0.0
        %864 = vmatprep.subr.mxu0 0.0
        %865 = vmatpush2.msra.mxu0 0.0
        %866 = vmatprep.subr.mxu0 0.0
        %867 = vmatpush2.msra.mxu0 0.0
        %868 = vmatprep.subr.mxu0 0.0
        %869 = vmatpush2.msra.mxu0 0.0
        %870 = vmatprep.subr.mxu0 0.0
        %871 = vmatpush2.msra.mxu0 0.0
        %872 = vmatprep.subr.mxu0 0.0
        %873 = vmatpush2.msra.mxu0 0.0
        %874 = vmatprep.subr.mxu0 0.0
        %875 = vmatpush2.msra.mxu0 0.0
        %876 = vmatprep.subr.mxu0 0.0
        %877 = vmatpush2.msra.mxu0 0.0
        %878 = vmatprep.subr.mxu0 0.0
        %879 = vmatpush2.msra.mxu0 0.0
        %880 = vmatprep.subr.mxu0 0.0
        %881 = vmatpush2.msra.mxu0 0.0
        %882 = vmatprep.subr.mxu0 0.0
        %883 = vmatpush2.msra.mxu0 0.0
        %884 = vmatprep.subr.mxu0 0.0
        %885 = vmatpush2.msra.mxu0 0.0
        %886 = vmatprep.subr.mxu0 0.0
        %887 = vmatpush2.msra.mxu0 0.0
        %888 = vmatprep.mubr.f32.mxu0 0.0
        %889 = vmatmul.mubr.f32.gmra.mxu0 %v241
        %v890 = vpop.f32.mrf.mxu0
        %v891 = vadd.f32 %v460, %v890
        %v892 = vpop.f32.mrf.mxu0
        %893 = vmatprep.mubr.f32.mxu0 0.0
        %894 = vmatmul.mubr.f32.gmra.mxu0 %v242
        %v895 = vpop.f32.mrf.mxu0
        %v896 = vadd.f32 %v464, %v895
        %v897 = vpop.f32.mrf.mxu0
        %898 = vmatprep.mubr.f32.mxu0 0.0
        %899 = vmatmul.mubr.f32.gmra.mxu0 %v243
        %v900 = vpop.f32.mrf.mxu0
        %v901 = vadd.f32 %v468, %v900
        %v902 = vpop.f32.mrf.mxu0
        %903 = vmatprep.mubr.f32.mxu0 0.0
        %904 = vmatmul.mubr.f32.gmra.mxu0 %v244
        %v905 = vpop.f32.mrf.mxu0
        %v906 = vadd.f32 %v472, %v905
        %v907 = vpop.f32.mrf.mxu0
        %908 = vmatprep.mubr.f32.mxu0 0.0
        %909 = vmatmul.mubr.f32.gmra.mxu0 %v245
        %v910 = vpop.f32.mrf.mxu0
        %v911 = vadd.f32 %v476, %v910
        %v912 = vpop.f32.mrf.mxu0
        %913 = vmatprep.mubr.f32.mxu0 0.0
        %914 = vmatmul.mubr.f32.gmra.mxu0 %v246
        %v915 = vpop.f32.mrf.mxu0
        %v916 = vadd.f32 %v480, %v915
        %v917 = vpop.f32.mrf.mxu0
        %918 = vmatprep.mubr.f32.mxu0 0.0
        %919 = vmatmul.mubr.f32.gmra.mxu0 %v247
        %v920 = vpop.f32.mrf.mxu0
        %v921 = vadd.f32 %v484, %v920
        %v922 = vpop.f32.mrf.mxu0
        %923 = vmatprep.mubr.f32.mxu0 0.0
        %924 = vmatmul.mubr.f32.gmra.mxu0 %v248
        %v925 = vpop.f32.mrf.mxu0
        %v926 = vadd.f32 %v488, %v925
        %v927 = vpop.f32.mrf.mxu0
        %928 = vmatprep.mubr.f32.mxu0 0.0
        %929 = vmatmul.mubr.f32.gmra.mxu0 %v249
        %v930 = vpop.f32.mrf.mxu0
        %v931 = vadd.f32 %v492, %v930
        %v932 = vpop.f32.mrf.mxu0
        %933 = vmatprep.mubr.f32.mxu0 0.0
        %934 = vmatmul.mubr.f32.gmra.mxu0 %v250
        %v935 = vpop.f32.mrf.mxu0
        %v936 = vadd.f32 %v496, %v935
        %v937 = vpop.f32.mrf.mxu0
        %938 = vmatprep.mubr.f32.mxu0 0.0
        %939 = vmatmul.mubr.f32.gmra.mxu0 %v251
        %v940 = vpop.f32.mrf.mxu0
        %v941 = vadd.f32 %v500, %v940
        %v942 = vpop.f32.mrf.mxu0
        %943 = vmatprep.mubr.f32.mxu0 0.0
        %944 = vmatmul.mubr.f32.gmra.mxu0 %v252
        %v945 = vpop.f32.mrf.mxu0
        %v946 = vadd.f32 %v504, %v945
        %v947 = vpop.f32.mrf.mxu0
        %948 = vmatprep.mubr.f32.mxu0 0.0
        %949 = vmatmul.mubr.f32.gmra.mxu0 %v253
        %v950 = vpop.f32.mrf.mxu0
        %v951 = vadd.f32 %v508, %v950
        %v952 = vpop.f32.mrf.mxu0
        %953 = vmatprep.mubr.f32.mxu0 0.0
        %954 = vmatmul.mubr.f32.gmra.mxu0 %v254
        %v955 = vpop.f32.mrf.mxu0
        %v956 = vadd.f32 %v512, %v955
        %v957 = vpop.f32.mrf.mxu0
        %958 = vmatprep.mubr.f32.mxu0 0.0
        %959 = vmatmul.mubr.f32.gmra.mxu0 %v255
        %v960 = vpop.f32.mrf.mxu0
        %v961 = vadd.f32 %v516, %v960
        %v962 = vpop.f32.mrf.mxu0
        %963 = vmatprep.mubr.f32.mxu0 0.0
        %964 = vmatmul.mubr.f32.gmra.mxu0 %v256
        %v965 = vpop.f32.mrf.mxu0
        %v966 = vadd.f32 %v520, %v965
        %v967 = vpop.f32.mrf.mxu0
        %968 = vdwg.mxu0
        %v969 = vmax.f32 %v891, 0.0
        %v970 = vmax.f32 %v896, 0.0
        %v971 = vmax.f32 %v901, 0.0
        %v972 = vmax.f32 %v906, 0.0
        %v973 = vmax.f32 %v911, 0.0
        %v974 = vmax.f32 %v916, 0.0
        %v975 = vmax.f32 %v921, 0.0
        %v976 = vmax.f32 %v926, 0.0
        %v977 = vmax.f32 %v931, 0.0
        %v978 = vmax.f32 %v936, 0.0
        %v979 = vmax.f32 %v941, 0.0
        %v980 = vmax.f32 %v946, 0.0
        %v981 = vmax.f32 %v951, 0.0
        %v982 = vmax.f32 %v956, 0.0
        %v983 = vmax.f32 %v961, 0.0
        %v984 = vmax.f32 %v966, 0.0
        %985 = vmatprep.subr.mxu0 0.0
        %986 = vmatpush1.msra.mxu0 %v984
        %987 = vmatprep.subr.mxu0 0.0
        %988 = vmatpush1.msra.mxu0 %v983
        %989 = vmatprep.subr.mxu0 0.0
        %990 = vmatpush1.msra.mxu0 %v982
        %991 = vmatprep.subr.mxu0 0.0
        %992 = vmatpush1.msra.mxu0 %v981
        %993 = vmatprep.subr.mxu0 0.0
        %994 = vmatpush1.msra.mxu0 %v980
        %995 = vmatprep.subr.mxu0 0.0
        %996 = vmatpush1.msra.mxu0 %v979
        %997 = vmatprep.subr.mxu0 0.0
        %998 = vmatpush1.msra.mxu0 %v978
        %999 = vmatprep.subr.mxu0 0.0
        %1000 = vmatpush1.msra.mxu0 %v977
        %1001 = vmatprep.subr.mxu0 0.0
        %1002 = vmatpush1.msra.mxu0 %v976
        %1003 = vmatprep.subr.mxu0 0.0
        %1004 = vmatpush1.msra.mxu0 %v975
        %1005 = vmatprep.subr.mxu0 0.0
        %1006 = vmatpush1.msra.mxu0 %v974
        %1007 = vmatprep.subr.mxu0 0.0
        %1008 = vmatpush1.msra.mxu0 %v973
        %1009 = vmatprep.subr.mxu0 0.0
        %1010 = vmatpush1.msra.mxu0 %v972
        %1011 = vmatprep.subr.mxu0 0.0
        %1012 = vmatpush1.msra.mxu0 %v971
        %1013 = vmatprep.subr.mxu0 0.0
        %1014 = vmatpush1.msra.mxu0 %v970
        %1015 = vmatprep.subr.mxu0 0.0
        %1016 = vmatpush1.msra.mxu0 %v969
        %1017 = vmatprep.subr.mxu0 0.0
        %1018 = vmatpush2.msra.mxu0 0.0
        %1019 = vmatprep.subr.mxu0 0.0
        %1020 = vmatpush2.msra.mxu0 0.0
        %1021 = vmatprep.subr.mxu0 0.0
        %1022 = vmatpush2.msra.mxu0 0.0
        %1023 = vmatprep.subr.mxu0 0.0
        %1024 = vmatpush2.msra.mxu0 0.0
        %1025 = vmatprep.subr.mxu0 0.0
        %1026 = vmatpush2.msra.mxu0 0.0
        %1027 = vmatprep.subr.mxu0 0.0
        %1028 = vmatpush2.msra.mxu0 0.0
        %1029 = vmatprep.subr.mxu0 0.0
        %1030 = vmatpush2.msra.mxu0 0.0
        %1031 = vmatprep.subr.mxu0 0.0
        %1032 = vmatpush2.msra.mxu0 0.0
        %1033 = vmatprep.subr.mxu0 0.0
        %1034 = vmatpush2.msra.mxu0 0.0
        %1035 = vmatprep.subr.mxu0 0.0
        %1036 = vmatpush2.msra.mxu0 0.0
        %1037 = vmatprep.subr.mxu0 0.0
        %1038 = vmatpush2.msra.mxu0 0.0
        %1039 = vmatprep.subr.mxu0 0.0
        %1040 = vmatpush2.msra.mxu0 0.0
        %1041 = vmatprep.subr.mxu0 0.0
        %1042 = vmatpush2.msra.mxu0 0.0
        %1043 = vmatprep.subr.mxu0 0.0
        %1044 = vmatpush2.msra.mxu0 0.0
        %1045 = vmatprep.subr.mxu0 0.0
        %1046 = vmatpush2.msra.mxu0 0.0
        %1047 = vmatprep.subr.mxu0 0.0
        %1048 = vmatpush2.msra.mxu0 0.0
        %1049 = vmatprep.mubr.f32.mxu0 0.0
        %1050 = vmatmul.mubr.f32.gmra.mxu0 %v257
        %v1051 = vpop.f32.mrf.mxu0
        %v1052 = vadd.f32 %v691, %v1051
        %v1053 = vpop.f32.mrf.mxu0
        %1054 = vdwg.mxu0
        %v1055 = vtanh.pop %v1052
        %s1056 = scalar_lea.vmem %s218, 1 [#allocation3]
        %1057 = vst.msk [vmem:[%s1056] sm:$0x1] %vm766, %v1055
        %s1058 = scalar_lea.vmem %s222, 2
        %v1059 = vld [vmem:[%s1058] sm:$0x1]
        %v1061 = vlaneseq
        %v1062 = vshrl.u32 %v1061, 7
        %v1063 = vsub.s32 0, %v1062
        %v1064 = vrot.slane %v1059, %v1063
        %v1066 = vmul.f32 %v263, %v1064
        %v1067 = vmul.f32 %v268, %v1064
        %v1068 = vmul.f32 %v273, %v1064
        %v1069 = vmul.f32 %v278, %v1064
        %v1070 = vmul.f32 %v283, %v1064
        %v1071 = vmul.f32 %v288, %v1064
        %v1072 = vmul.f32 %v293, %v1064
        %v1073 = vmul.f32 %v298, %v1064
        %v1074 = vmul.f32 %v303, %v1064
        %v1075 = vmul.f32 %v308, %v1064
        %v1076 = vmul.f32 %v313, %v1064
        %v1077 = vmul.f32 %v318, %v1064
        %v1078 = vmul.f32 %v323, %v1064
        %v1079 = vmul.f32 %v328, %v1064
        %v1080 = vmul.f32 %v333, %v1064
        %v1081 = vmul.f32 %v338, %v1064
        %v1082 = vadd.f32 %v1066, %v364
        %v1083 = vadd.f32 %v1067, %v368
        %v1084 = vadd.f32 %v1068, %v372
        %v1085 = vadd.f32 %v1069, %v376
        %v1086 = vadd.f32 %v1070, %v380
        %v1087 = vadd.f32 %v1071, %v384
        %v1088 = vadd.f32 %v1072, %v388
        %v1089 = vadd.f32 %v1073, %v392
        %v1090 = vadd.f32 %v1074, %v396
        %v1091 = vadd.f32 %v1075, %v400
        %v1092 = vadd.f32 %v1076, %v404
        %v1093 = vadd.f32 %v1077, %v408
        %v1094 = vadd.f32 %v1078, %v412
        %v1095 = vadd.f32 %v1079, %v416
        %v1096 = vadd.f32 %v1080, %v420
        %v1097 = vadd.f32 %v1081, %v424
        %v1098 = vmax.f32 %v1082, 0.0
        %v1099 = vmax.f32 %v1083, 0.0
        %v1100 = vmax.f32 %v1084, 0.0
        %v1101 = vmax.f32 %v1085, 0.0
        %v1102 = vmax.f32 %v1086, 0.0
        %v1103 = vmax.f32 %v1087, 0.0
        %v1104 = vmax.f32 %v1088, 0.0
        %v1105 = vmax.f32 %v1089, 0.0
        %v1106 = vmax.f32 %v1090, 0.0
        %v1107 = vmax.f32 %v1091, 0.0
        %v1108 = vmax.f32 %v1092, 0.0
        %v1109 = vmax.f32 %v1093, 0.0
        %v1110 = vmax.f32 %v1094, 0.0
        %v1111 = vmax.f32 %v1095, 0.0
        %v1112 = vmax.f32 %v1096, 0.0
        %v1113 = vmax.f32 %v1097, 0.0
        %1114 = vmatprep.subr.mxu0 0.0
        %1115 = vmatpush1.msra.mxu0 %v1113
        %1116 = vmatprep.subr.mxu0 0.0
        %1117 = vmatpush1.msra.mxu0 %v1112
        %1118 = vmatprep.subr.mxu0 0.0
        %1119 = vmatpush1.msra.mxu0 %v1111
        %1120 = vmatprep.subr.mxu0 0.0
        %1121 = vmatpush1.msra.mxu0 %v1110
        %1122 = vmatprep.subr.mxu0 0.0
        %1123 = vmatpush1.msra.mxu0 %v1109
        %1124 = vmatprep.subr.mxu0 0.0
        %1125 = vmatpush1.msra.mxu0 %v1108
        %1126 = vmatprep.subr.mxu0 0.0
        %1127 = vmatpush1.msra.mxu0 %v1107
        %1128 = vmatprep.subr.mxu0 0.0
        %1129 = vmatpush1.msra.mxu0 %v1106
        %1130 = vmatprep.subr.mxu0 0.0
        %1131 = vmatpush1.msra.mxu0 %v1105
        %1132 = vmatprep.subr.mxu0 0.0
        %1133 = vmatpush1.msra.mxu0 %v1104
        %1134 = vmatprep.subr.mxu0 0.0
        %1135 = vmatpush1.msra.mxu0 %v1103
        %1136 = vmatprep.subr.mxu0 0.0
        %1137 = vmatpush1.msra.mxu0 %v1102
        %1138 = vmatprep.subr.mxu0 0.0
        %1139 = vmatpush1.msra.mxu0 %v1101
        %1140 = vmatprep.subr.mxu0 0.0
        %1141 = vmatpush1.msra.mxu0 %v1100
        %1142 = vmatprep.subr.mxu0 0.0
        %1143 = vmatpush1.msra.mxu0 %v1099
        %1144 = vmatprep.subr.mxu0 0.0
        %1145 = vmatpush1.msra.mxu0 %v1098
        %1146 = vmatprep.subr.mxu0 0.0
        %1147 = vmatpush2.msra.mxu0 0.0
        %1148 = vmatprep.subr.mxu0 0.0
        %1149 = vmatpush2.msra.mxu0 0.0
        %1150 = vmatprep.subr.mxu0 0.0
        %1151 = vmatpush2.msra.mxu0 0.0
        %1152 = vmatprep.subr.mxu0 0.0
        %1153 = vmatpush2.msra.mxu0 0.0
        %1154 = vmatprep.subr.mxu0 0.0
        %1155 = vmatpush2.msra.mxu0 0.0
        %1156 = vmatprep.subr.mxu0 0.0
        %1157 = vmatpush2.msra.mxu0 0.0
        %1158 = vmatprep.subr.mxu0 0.0
        %1159 = vmatpush2.msra.mxu0 0.0
        %1160 = vmatprep.subr.mxu0 0.0
        %1161 = vmatpush2.msra.mxu0 0.0
        %1162 = vmatprep.subr.mxu0 0.0
        %1163 = vmatpush2.msra.mxu0 0.0
        %1164 = vmatprep.subr.mxu0 0.0
        %1165 = vmatpush2.msra.mxu0 0.0
        %1166 = vmatprep.subr.mxu0 0.0
        %1167 = vmatpush2.msra.mxu0 0.0
        %1168 = vmatprep.subr.mxu0 0.0
        %1169 = vmatpush2.msra.mxu0 0.0
        %1170 = vmatprep.subr.mxu0 0.0
        %1171 = vmatpush2.msra.mxu0 0.0
        %1172 = vmatprep.subr.mxu0 0.0
        %1173 = vmatpush2.msra.mxu0 0.0
        %1174 = vmatprep.subr.mxu0 0.0
        %1175 = vmatpush2.msra.mxu0 0.0
        %1176 = vmatprep.subr.mxu0 0.0
        %1177 = vmatpush2.msra.mxu0 0.0
        %1178 = vmatprep.mubr.f32.mxu0 0.0
        %1179 = vmatmul.mubr.f32.gmra.mxu0 %v241
        %v1180 = vpop.f32.mrf.mxu0
        %v1181 = vadd.f32 %v460, %v1180
        %v1182 = vpop.f32.mrf.mxu0
        %1183 = vmatprep.mubr.f32.mxu0 0.0
        %1184 = vmatmul.mubr.f32.gmra.mxu0 %v242
        %v1185 = vpop.f32.mrf.mxu0
        %v1186 = vadd.f32 %v464, %v1185
        %v1187 = vpop.f32.mrf.mxu0
        %1188 = vmatprep.mubr.f32.mxu0 0.0
        %1189 = vmatmul.mubr.f32.gmra.mxu0 %v243
        %v1190 = vpop.f32.mrf.mxu0
        %v1191 = vadd.f32 %v468, %v1190
        %v1192 = vpop.f32.mrf.mxu0
        %1193 = vmatprep.mubr.f32.mxu0 0.0
        %1194 = vmatmul.mubr.f32.gmra.mxu0 %v244
        %v1195 = vpop.f32.mrf.mxu0
        %v1196 = vadd.f32 %v472, %v1195
        %v1197 = vpop.f32.mrf.mxu0
        %1198 = vmatprep.mubr.f32.mxu0 0.0
        %1199 = vmatmul.mubr.f32.gmra.mxu0 %v245
        %v1200 = vpop.f32.mrf.mxu0
        %v1201 = vadd.f32 %v476, %v1200
        %v1202 = vpop.f32.mrf.mxu0
        %1203 = vmatprep.mubr.f32.mxu0 0.0
        %1204 = vmatmul.mubr.f32.gmra.mxu0 %v246
        %v1205 = vpop.f32.mrf.mxu0
        %v1206 = vadd.f32 %v480, %v1205
        %v1207 = vpop.f32.mrf.mxu0
        %1208 = vmatprep.mubr.f32.mxu0 0.0
        %1209 = vmatmul.mubr.f32.gmra.mxu0 %v247
        %v1210 = vpop.f32.mrf.mxu0
        %v1211 = vadd.f32 %v484, %v1210
        %v1212 = vpop.f32.mrf.mxu0
        %1213 = vmatprep.mubr.f32.mxu0 0.0
        %1214 = vmatmul.mubr.f32.gmra.mxu0 %v248
        %v1215 = vpop.f32.mrf.mxu0
        %v1216 = vadd.f32 %v488, %v1215
        %v1217 = vpop.f32.mrf.mxu0
        %1218 = vmatprep.mubr.f32.mxu0 0.0
        %1219 = vmatmul.mubr.f32.gmra.mxu0 %v249
        %v1220 = vpop.f32.mrf.mxu0
        %v1221 = vadd.f32 %v492, %v1220
        %v1222 = vpop.f32.mrf.mxu0
        %1223 = vmatprep.mubr.f32.mxu0 0.0
        %1224 = vmatmul.mubr.f32.gmra.mxu0 %v250
        %v1225 = vpop.f32.mrf.mxu0
        %v1226 = vadd.f32 %v496, %v1225
        %v1227 = vpop.f32.mrf.mxu0
        %1228 = vmatprep.mubr.f32.mxu0 0.0
        %1229 = vmatmul.mubr.f32.gmra.mxu0 %v251
        %v1230 = vpop.f32.mrf.mxu0
        %v1231 = vadd.f32 %v500, %v1230
        %v1232 = vpop.f32.mrf.mxu0
        %1233 = vmatprep.mubr.f32.mxu0 0.0
        %1234 = vmatmul.mubr.f32.gmra.mxu0 %v252
        %v1235 = vpop.f32.mrf.mxu0
        %v1236 = vadd.f32 %v504, %v1235
        %v1237 = vpop.f32.mrf.mxu0
        %1238 = vmatprep.mubr.f32.mxu0 0.0
        %1239 = vmatmul.mubr.f32.gmra.mxu0 %v253
        %v1240 = vpop.f32.mrf.mxu0
        %v1241 = vadd.f32 %v508, %v1240
        %v1242 = vpop.f32.mrf.mxu0
        %1243 = vmatprep.mubr.f32.mxu0 0.0
        %1244 = vmatmul.mubr.f32.gmra.mxu0 %v254
        %v1245 = vpop.f32.mrf.mxu0
        %v1246 = vadd.f32 %v512, %v1245
        %v1247 = vpop.f32.mrf.mxu0
        %1248 = vmatprep.mubr.f32.mxu0 0.0
        %1249 = vmatmul.mubr.f32.gmra.mxu0 %v255
        %v1250 = vpop.f32.mrf.mxu0
        %v1251 = vadd.f32 %v516, %v1250
        %v1252 = vpop.f32.mrf.mxu0
        %1253 = vmatprep.mubr.f32.mxu0 0.0
        %1254 = vmatmul.mubr.f32.gmra.mxu0 %v256
        %v1255 = vpop.f32.mrf.mxu0
        %v1256 = vadd.f32 %v520, %v1255
        %v1257 = vpop.f32.mrf.mxu0
        %1258 = vdwg.mxu0
        %v1259 = vmax.f32 %v1181, 0.0
        %v1260 = vmax.f32 %v1186, 0.0
        %v1261 = vmax.f32 %v1191, 0.0
        %v1262 = vmax.f32 %v1196, 0.0
        %v1263 = vmax.f32 %v1201, 0.0
        %v1264 = vmax.f32 %v1206, 0.0
        %v1265 = vmax.f32 %v1211, 0.0
        %v1266 = vmax.f32 %v1216, 0.0
        %v1267 = vmax.f32 %v1221, 0.0
        %v1268 = vmax.f32 %v1226, 0.0
        %v1269 = vmax.f32 %v1231, 0.0
        %v1270 = vmax.f32 %v1236, 0.0
        %v1271 = vmax.f32 %v1241, 0.0
        %v1272 = vmax.f32 %v1246, 0.0
        %v1273 = vmax.f32 %v1251, 0.0
        %v1274 = vmax.f32 %v1256, 0.0
        %1275 = vmatprep.subr.mxu0 0.0
        %1276 = vmatpush1.msra.mxu0 %v1274
        %1277 = vmatprep.subr.mxu0 0.0
        %1278 = vmatpush1.msra.mxu0 %v1273
        %1279 = vmatprep.subr.mxu0 0.0
        %1280 = vmatpush1.msra.mxu0 %v1272
        %1281 = vmatprep.subr.mxu0 0.0
        %1282 = vmatpush1.msra.mxu0 %v1271
        %1283 = vmatprep.subr.mxu0 0.0
        %1284 = vmatpush1.msra.mxu0 %v1270
        %1285 = vmatprep.subr.mxu0 0.0
        %1286 = vmatpush1.msra.mxu0 %v1269
        %1287 = vmatprep.subr.mxu0 0.0
        %1288 = vmatpush1.msra.mxu0 %v1268
        %1289 = vmatprep.subr.mxu0 0.0
        %1290 = vmatpush1.msra.mxu0 %v1267
        %1291 = vmatprep.subr.mxu0 0.0
        %1292 = vmatpush1.msra.mxu0 %v1266
        %1293 = vmatprep.subr.mxu0 0.0
        %1294 = vmatpush1.msra.mxu0 %v1265
        %1295 = vmatprep.subr.mxu0 0.0
        %1296 = vmatpush1.msra.mxu0 %v1264
        %1297 = vmatprep.subr.mxu0 0.0
        %1298 = vmatpush1.msra.mxu0 %v1263
        %1299 = vmatprep.subr.mxu0 0.0
        %1300 = vmatpush1.msra.mxu0 %v1262
        %1301 = vmatprep.subr.mxu0 0.0
        %1302 = vmatpush1.msra.mxu0 %v1261
        %1303 = vmatprep.subr.mxu0 0.0
        %1304 = vmatpush1.msra.mxu0 %v1260
        %1305 = vmatprep.subr.mxu0 0.0
        %1306 = vmatpush1.msra.mxu0 %v1259
        %1307 = vmatprep.subr.mxu0 0.0
        %1308 = vmatpush2.msra.mxu0 0.0
        %1309 = vmatprep.subr.mxu0 0.0
        %1310 = vmatpush2.msra.mxu0 0.0
        %1311 = vmatprep.subr.mxu0 0.0
        %1312 = vmatpush2.msra.mxu0 0.0
        %1313 = vmatprep.subr.mxu0 0.0
        %1314 = vmatpush2.msra.mxu0 0.0
        %1315 = vmatprep.subr.mxu0 0.0
        %1316 = vmatpush2.msra.mxu0 0.0
        %1317 = vmatprep.subr.mxu0 0.0
        %1318 = vmatpush2.msra.mxu0 0.0
        %1319 = vmatprep.subr.mxu0 0.0
        %1320 = vmatpush2.msra.mxu0 0.0
        %1321 = vmatprep.subr.mxu0 0.0
        %1322 = vmatpush2.msra.mxu0 0.0
        %1323 = vmatprep.subr.mxu0 0.0
        %1324 = vmatpush2.msra.mxu0 0.0
        %1325 = vmatprep.subr.mxu0 0.0
        %1326 = vmatpush2.msra.mxu0 0.0
        %1327 = vmatprep.subr.mxu0 0.0
        %1328 = vmatpush2.msra.mxu0 0.0
        %1329 = vmatprep.subr.mxu0 0.0
        %1330 = vmatpush2.msra.mxu0 0.0
        %1331 = vmatprep.subr.mxu0 0.0
        %1332 = vmatpush2.msra.mxu0 0.0
        %1333 = vmatprep.subr.mxu0 0.0
        %1334 = vmatpush2.msra.mxu0 0.0
        %1335 = vmatprep.subr.mxu0 0.0
        %1336 = vmatpush2.msra.mxu0 0.0
        %1337 = vmatprep.subr.mxu0 0.0
        %1338 = vmatpush2.msra.mxu0 0.0
        %1339 = vmatprep.mubr.f32.mxu0 0.0
        %1340 = vmatmul.mubr.f32.gmra.mxu0 %v257
        %v1341 = vpop.f32.mrf.mxu0
        %v1342 = vadd.f32 %v691, %v1341
        %v1343 = vpop.f32.mrf.mxu0
        %1344 = vdwg.mxu0
        %v1345 = vtanh.pop %v1342
        %s1346 = scalar_lea.vmem %s218, 2 [#allocation3]
        %1347 = vst.msk [vmem:[%s1346] sm:$0x1] %vm766, %v1345
        %s1348 = scalar_lea.vmem %s222, 3
        %v1349 = vld [vmem:[%s1348] sm:$0x1]
        %v1351 = vlaneseq
        %v1352 = vshrl.u32 %v1351, 7
        %v1353 = vsub.s32 0, %v1352
        %v1354 = vrot.slane %v1349, %v1353
        %v1356 = vmul.f32 %v263, %v1354
        %v1357 = vmul.f32 %v268, %v1354
        %v1358 = vmul.f32 %v273, %v1354
        %v1359 = vmul.f32 %v278, %v1354
        %v1360 = vmul.f32 %v283, %v1354
        %v1361 = vmul.f32 %v288, %v1354
        %v1362 = vmul.f32 %v293, %v1354
        %v1363 = vmul.f32 %v298, %v1354
        %v1364 = vmul.f32 %v303, %v1354
        %v1365 = vmul.f32 %v308, %v1354
        %v1366 = vmul.f32 %v313, %v1354
        %v1367 = vmul.f32 %v318, %v1354
        %v1368 = vmul.f32 %v323, %v1354
        %v1369 = vmul.f32 %v328, %v1354
        %v1370 = vmul.f32 %v333, %v1354
        %v1371 = vmul.f32 %v338, %v1354
        %v1372 = vadd.f32 %v1356, %v364
        %v1373 = vadd.f32 %v1357, %v368
        %v1374 = vadd.f32 %v1358, %v372
        %v1375 = vadd.f32 %v1359, %v376
        %v1376 = vadd.f32 %v1360, %v380
        %v1377 = vadd.f32 %v1361, %v384
        %v1378 = vadd.f32 %v1362, %v388
        %v1379 = vadd.f32 %v1363, %v392
        %v1380 = vadd.f32 %v1364, %v396
        %v1381 = vadd.f32 %v1365, %v400
        %v1382 = vadd.f32 %v1366, %v404
        %v1383 = vadd.f32 %v1367, %v408
        %v1384 = vadd.f32 %v1368, %v412
        %v1385 = vadd.f32 %v1369, %v416
        %v1386 = vadd.f32 %v1370, %v420
        %v1387 = vadd.f32 %v1371, %v424
        %v1388 = vmax.f32 %v1372, 0.0
        %v1389 = vmax.f32 %v1373, 0.0
        %v1390 = vmax.f32 %v1374, 0.0
        %v1391 = vmax.f32 %v1375, 0.0
        %v1392 = vmax.f32 %v1376, 0.0
        %v1393 = vmax.f32 %v1377, 0.0
        %v1394 = vmax.f32 %v1378, 0.0
        %v1395 = vmax.f32 %v1379, 0.0
        %v1396 = vmax.f32 %v1380, 0.0
        %v1397 = vmax.f32 %v1381, 0.0
        %v1398 = vmax.f32 %v1382, 0.0
        %v1399 = vmax.f32 %v1383, 0.0
        %v1400 = vmax.f32 %v1384, 0.0
        %v1401 = vmax.f32 %v1385, 0.0
        %v1402 = vmax.f32 %v1386, 0.0
        %v1403 = vmax.f32 %v1387, 0.0
        %1404 = vmatprep.subr.mxu0 0.0
        %1405 = vmatpush1.msra.mxu0 %v1403
        %1406 = vmatprep.subr.mxu0 0.0
        %1407 = vmatpush1.msra.mxu0 %v1402
        %1408 = vmatprep.subr.mxu0 0.0
        %1409 = vmatpush1.msra.mxu0 %v1401
        %1410 = vmatprep.subr.mxu0 0.0
        %1411 = vmatpush1.msra.mxu0 %v1400
        %1412 = vmatprep.subr.mxu0 0.0
        %1413 = vmatpush1.msra.mxu0 %v1399
        %1414 = vmatprep.subr.mxu0 0.0
        %1415 = vmatpush1.msra.mxu0 %v1398
        %1416 = vmatprep.subr.mxu0 0.0
        %1417 = vmatpush1.msra.mxu0 %v1397
        %1418 = vmatprep.subr.mxu0 0.0
        %1419 = vmatpush1.msra.mxu0 %v1396
        %1420 = vmatprep.subr.mxu0 0.0
        %1421 = vmatpush1.msra.mxu0 %v1395
        %1422 = vmatprep.subr.mxu0 0.0
        %1423 = vmatpush1.msra.mxu0 %v1394
        %1424 = vmatprep.subr.mxu0 0.0
        %1425 = vmatpush1.msra.mxu0 %v1393
        %1426 = vmatprep.subr.mxu0 0.0
        %1427 = vmatpush1.msra.mxu0 %v1392
        %1428 = vmatprep.subr.mxu0 0.0
        %1429 = vmatpush1.msra.mxu0 %v1391
        %1430 = vmatprep.subr.mxu0 0.0
        %1431 = vmatpush1.msra.mxu0 %v1390
        %1432 = vmatprep.subr.mxu0 0.0
        %1433 = vmatpush1.msra.mxu0 %v1389
        %1434 = vmatprep.subr.mxu0 0.0
        %1435 = vmatpush1.msra.mxu0 %v1388
        %1436 = vmatprep.subr.mxu0 0.0
        %1437 = vmatpush2.msra.mxu0 0.0
        %1438 = vmatprep.subr.mxu0 0.0
        %1439 = vmatpush2.msra.mxu0 0.0
        %1440 = vmatprep.subr.mxu0 0.0
        %1441 = vmatpush2.msra.mxu0 0.0
        %1442 = vmatprep.subr.mxu0 0.0
        %1443 = vmatpush2.msra.mxu0 0.0
        %1444 = vmatprep.subr.mxu0 0.0
        %1445 = vmatpush2.msra.mxu0 0.0
        %1446 = vmatprep.subr.mxu0 0.0
        %1447 = vmatpush2.msra.mxu0 0.0
        %1448 = vmatprep.subr.mxu0 0.0
        %1449 = vmatpush2.msra.mxu0 0.0
        %1450 = vmatprep.subr.mxu0 0.0
        %1451 = vmatpush2.msra.mxu0 0.0
        %1452 = vmatprep.subr.mxu0 0.0
        %1453 = vmatpush2.msra.mxu0 0.0
        %1454 = vmatprep.subr.mxu0 0.0
        %1455 = vmatpush2.msra.mxu0 0.0
        %1456 = vmatprep.subr.mxu0 0.0
        %1457 = vmatpush2.msra.mxu0 0.0
        %1458 = vmatprep.subr.mxu0 0.0
        %1459 = vmatpush2.msra.mxu0 0.0
        %1460 = vmatprep.subr.mxu0 0.0
        %1461 = vmatpush2.msra.mxu0 0.0
        %1462 = vmatprep.subr.mxu0 0.0
        %1463 = vmatpush2.msra.mxu0 0.0
        %1464 = vmatprep.subr.mxu0 0.0
        %1465 = vmatpush2.msra.mxu0 0.0
        %1466 = vmatprep.subr.mxu0 0.0
        %1467 = vmatpush2.msra.mxu0 0.0
        %1468 = vmatprep.mubr.f32.mxu0 0.0
        %1469 = vmatmul.mubr.f32.gmra.mxu0 %v241
        %v1470 = vpop.f32.mrf.mxu0
        %v1471 = vadd.f32 %v460, %v1470
        %v1472 = vpop.f32.mrf.mxu0
        %1473 = vmatprep.mubr.f32.mxu0 0.0
        %1474 = vmatmul.mubr.f32.gmra.mxu0 %v242
        %v1475 = vpop.f32.mrf.mxu0
        %v1476 = vadd.f32 %v464, %v1475
        %v1477 = vpop.f32.mrf.mxu0
        %1478 = vmatprep.mubr.f32.mxu0 0.0
        %1479 = vmatmul.mubr.f32.gmra.mxu0 %v243
        %v1480 = vpop.f32.mrf.mxu0
        %v1481 = vadd.f32 %v468, %v1480
        %v1482 = vpop.f32.mrf.mxu0
        %1483 = vmatprep.mubr.f32.mxu0 0.0
        %1484 = vmatmul.mubr.f32.gmra.mxu0 %v244
        %v1485 = vpop.f32.mrf.mxu0
        %v1486 = vadd.f32 %v472, %v1485
        %v1487 = vpop.f32.mrf.mxu0
        %1488 = vmatprep.mubr.f32.mxu0 0.0
        %1489 = vmatmul.mubr.f32.gmra.mxu0 %v245
        %v1490 = vpop.f32.mrf.mxu0
        %v1491 = vadd.f32 %v476, %v1490
        %v1492 = vpop.f32.mrf.mxu0
        %1493 = vmatprep.mubr.f32.mxu0 0.0
        %1494 = vmatmul.mubr.f32.gmra.mxu0 %v246
        %v1495 = vpop.f32.mrf.mxu0
        %v1496 = vadd.f32 %v480, %v1495
        %v1497 = vpop.f32.mrf.mxu0
        %1498 = vmatprep.mubr.f32.mxu0 0.0
        %1499 = vmatmul.mubr.f32.gmra.mxu0 %v247
        %v1500 = vpop.f32.mrf.mxu0
        %v1501 = vadd.f32 %v484, %v1500
        %v1502 = vpop.f32.mrf.mxu0
        %1503 = vmatprep.mubr.f32.mxu0 0.0
        %1504 = vmatmul.mubr.f32.gmra.mxu0 %v248
        %v1505 = vpop.f32.mrf.mxu0
        %v1506 = vadd.f32 %v488, %v1505
        %v1507 = vpop.f32.mrf.mxu0
        %1508 = vmatprep.mubr.f32.mxu0 0.0
        %1509 = vmatmul.mubr.f32.gmra.mxu0 %v249
        %v1510 = vpop.f32.mrf.mxu0
        %v1511 = vadd.f32 %v492, %v1510
        %v1512 = vpop.f32.mrf.mxu0
        %1513 = vmatprep.mubr.f32.mxu0 0.0
        %1514 = vmatmul.mubr.f32.gmra.mxu0 %v250
        %v1515 = vpop.f32.mrf.mxu0
        %v1516 = vadd.f32 %v496, %v1515
        %v1517 = vpop.f32.mrf.mxu0
        %1518 = vmatprep.mubr.f32.mxu0 0.0
        %1519 = vmatmul.mubr.f32.gmra.mxu0 %v251
        %v1520 = vpop.f32.mrf.mxu0
        %v1521 = vadd.f32 %v500, %v1520
        %v1522 = vpop.f32.mrf.mxu0
        %1523 = vmatprep.mubr.f32.mxu0 0.0
        %1524 = vmatmul.mubr.f32.gmra.mxu0 %v252
        %v1525 = vpop.f32.mrf.mxu0
        %v1526 = vadd.f32 %v504, %v1525
        %v1527 = vpop.f32.mrf.mxu0
        %1528 = vmatprep.mubr.f32.mxu0 0.0
        %1529 = vmatmul.mubr.f32.gmra.mxu0 %v253
        %v1530 = vpop.f32.mrf.mxu0
        %v1531 = vadd.f32 %v508, %v1530
        %v1532 = vpop.f32.mrf.mxu0
        %1533 = vmatprep.mubr.f32.mxu0 0.0
        %1534 = vmatmul.mubr.f32.gmra.mxu0 %v254
        %v1535 = vpop.f32.mrf.mxu0
        %v1536 = vadd.f32 %v512, %v1535
        %v1537 = vpop.f32.mrf.mxu0
        %1538 = vmatprep.mubr.f32.mxu0 0.0
        %1539 = vmatmul.mubr.f32.gmra.mxu0 %v255
        %v1540 = vpop.f32.mrf.mxu0
        %v1541 = vadd.f32 %v516, %v1540
        %v1542 = vpop.f32.mrf.mxu0
        %1543 = vmatprep.mubr.f32.mxu0 0.0
        %1544 = vmatmul.mubr.f32.gmra.mxu0 %v256
        %v1545 = vpop.f32.mrf.mxu0
        %v1546 = vadd.f32 %v520, %v1545
        %v1547 = vpop.f32.mrf.mxu0
        %1548 = vdwg.mxu0
        %v1549 = vmax.f32 %v1471, 0.0
        %v1550 = vmax.f32 %v1476, 0.0
        %v1551 = vmax.f32 %v1481, 0.0
        %v1552 = vmax.f32 %v1486, 0.0
        %v1553 = vmax.f32 %v1491, 0.0
        %v1554 = vmax.f32 %v1496, 0.0
        %v1555 = vmax.f32 %v1501, 0.0
        %v1556 = vmax.f32 %v1506, 0.0
        %v1557 = vmax.f32 %v1511, 0.0
        %v1558 = vmax.f32 %v1516, 0.0
        %v1559 = vmax.f32 %v1521, 0.0
        %v1560 = vmax.f32 %v1526, 0.0
        %v1561 = vmax.f32 %v1531, 0.0
        %v1562 = vmax.f32 %v1536, 0.0
        %v1563 = vmax.f32 %v1541, 0.0
        %v1564 = vmax.f32 %v1546, 0.0
        %1565 = vmatprep.subr.mxu0 0.0
        %1566 = vmatpush1.msra.mxu0 %v1564
        %1567 = vmatprep.subr.mxu0 0.0
        %1568 = vmatpush1.msra.mxu0 %v1563
        %1569 = vmatprep.subr.mxu0 0.0
        %1570 = vmatpush1.msra.mxu0 %v1562
        %1571 = vmatprep.subr.mxu0 0.0
        %1572 = vmatpush1.msra.mxu0 %v1561
        %1573 = vmatprep.subr.mxu0 0.0
        %1574 = vmatpush1.msra.mxu0 %v1560
        %1575 = vmatprep.subr.mxu0 0.0
        %1576 = vmatpush1.msra.mxu0 %v1559
        %1577 = vmatprep.subr.mxu0 0.0
        %1578 = vmatpush1.msra.mxu0 %v1558
        %1579 = vmatprep.subr.mxu0 0.0
        %1580 = vmatpush1.msra.mxu0 %v1557
        %1581 = vmatprep.subr.mxu0 0.0
        %1582 = vmatpush1.msra.mxu0 %v1556
        %1583 = vmatprep.subr.mxu0 0.0
        %1584 = vmatpush1.msra.mxu0 %v1555
        %1585 = vmatprep.subr.mxu0 0.0
        %1586 = vmatpush1.msra.mxu0 %v1554
        %1587 = vmatprep.subr.mxu0 0.0
        %1588 = vmatpush1.msra.mxu0 %v1553
        %1589 = vmatprep.subr.mxu0 0.0
        %1590 = vmatpush1.msra.mxu0 %v1552
        %1591 = vmatprep.subr.mxu0 0.0
        %1592 = vmatpush1.msra.mxu0 %v1551
        %1593 = vmatprep.subr.mxu0 0.0
        %1594 = vmatpush1.msra.mxu0 %v1550
        %1595 = vmatprep.subr.mxu0 0.0
        %1596 = vmatpush1.msra.mxu0 %v1549
        %1597 = vmatprep.subr.mxu0 0.0
        %1598 = vmatpush2.msra.mxu0 0.0
        %1599 = vmatprep.subr.mxu0 0.0
        %1600 = vmatpush2.msra.mxu0 0.0
        %1601 = vmatprep.subr.mxu0 0.0
        %1602 = vmatpush2.msra.mxu0 0.0
        %1603 = vmatprep.subr.mxu0 0.0
        %1604 = vmatpush2.msra.mxu0 0.0
        %1605 = vmatprep.subr.mxu0 0.0
        %1606 = vmatpush2.msra.mxu0 0.0
        %1607 = vmatprep.subr.mxu0 0.0
        %1608 = vmatpush2.msra.mxu0 0.0
        %1609 = vmatprep.subr.mxu0 0.0
        %1610 = vmatpush2.msra.mxu0 0.0
        %1611 = vmatprep.subr.mxu0 0.0
        %1612 = vmatpush2.msra.mxu0 0.0
        %1613 = vmatprep.subr.mxu0 0.0
        %1614 = vmatpush2.msra.mxu0 0.0
        %1615 = vmatprep.subr.mxu0 0.0
        %1616 = vmatpush2.msra.mxu0 0.0
        %1617 = vmatprep.subr.mxu0 0.0
        %1618 = vmatpush2.msra.mxu0 0.0
        %1619 = vmatprep.subr.mxu0 0.0
        %1620 = vmatpush2.msra.mxu0 0.0
        %1621 = vmatprep.subr.mxu0 0.0
        %1622 = vmatpush2.msra.mxu0 0.0
        %1623 = vmatprep.subr.mxu0 0.0
        %1624 = vmatpush2.msra.mxu0 0.0
        %1625 = vmatprep.subr.mxu0 0.0
        %1626 = vmatpush2.msra.mxu0 0.0
        %1627 = vmatprep.subr.mxu0 0.0
        %1628 = vmatpush2.msra.mxu0 0.0
        %1629 = vmatprep.mubr.f32.mxu0 0.0
        %1630 = vmatmul.mubr.f32.gmra.mxu0 %v257
        %v1631 = vpop.f32.mrf.mxu0
        %v1632 = vadd.f32 %v691, %v1631
        %v1633 = vpop.f32.mrf.mxu0
        %1634 = vdwg.mxu0
        %v1635 = vtanh.pop %v1632
        %s1636 = scalar_lea.vmem %s218, 3 [#allocation3]
        %1637 = vst.msk [vmem:[%s1636] sm:$0x1] %vm766, %v1635
        %s1638 = sand.u32 %s139, 1
        %s1639 = scalar_lea.sflag [#allocation4], %s1638
        %s1640 = sand.u32 %s139, 1
        %s1641 = smul.addr %s1640, 4
        %s1642 = scalar_lea.vmem [#allocation3], %s1641
        // Predicated region
        $region41: #{tpu_custom_call.1} parent=39 // pred_check
          %p1643 = pneg %p149
        $region42: #{tpu_custom_call.1} parent=39 // pred_check_branch
          %1645 = sbr.rel (%p1643) target = $region44
        $region43: #{tpu_custom_call.1} parent=39 // pred_region
          %s1646 = smul.u32 4, %s21
          %s1648 = ssub.s32 64, 64
          %1649 = vsyncadd %s1639, %s1648
          %s1650 = smul.addr %s1646, 16
          %s1651 = scalar_lea.hbm %s5, %s1650
          %s1653 = sshll.u32 %s1642, 4
          %s1654 = int_to_ptr.vmem [resolvable:$true] %s1653
          %1656 = dma.vmem_to_hbm [thread:$0]  %s1654, 64, %s1651, %s1639
        $region44: #{tpu_custom_call.1} parent=39 // pred_fallthru
          _
      $region40: #{tpu_custom_call.1} parent=5 // pred_fallthru
        _
      %p1657 = scmp.le.s32.totalorder 2, %s16
      // Predicated region
      $region45: #{tpu_custom_call.1} parent=5 // pred_check
        %p1658 = pneg %p1657
      $region46: #{tpu_custom_call.1} parent=5 // pred_check_branch
        %1660 = sbr.rel (%p1658) target = $region48
      $region47: #{tpu_custom_call.1} parent=5 // pred_region
        %s1661 = ssub.s32 %s16, 2
        // Predicated region
        $region49: #{tpu_custom_call.1} parent=47 // pred_check
          %p1662 = pneg %p155
        $region50: #{tpu_custom_call.1} parent=47 // pred_check_branch
          %1664 = sbr.rel (%p1662) target = $region52
        $region51: #{tpu_custom_call.1} parent=47 // pred_region
          %s1665 = sand.u32 %s140, 1
          %s1666 = scalar_lea.sflag [#allocation4], %s1665
          %s1667 = sand.u32 %s140, 1
          %s1668 = smul.addr %s1667, 4
          %s1669 = scalar_lea.vmem [#allocation3], %s1668
          %1670 = dma.done %s1666, 64
        $region52: #{tpu_custom_call.1} parent=47 // pred_fallthru
          _
      $region48: #{tpu_custom_call.1} parent=5 // pred_fallthru
        _
    $region6: #{tpu_custom_call.1} parent=1 // loop_footer
      %s20 = sadd.s32 1, %s16
    $region7: #{tpu_custom_call.1} parent=1 // loop_footer_branch
      %15 = sbr.rel target = $region3
    $region8: #{tpu_custom_call.1} parent=1 // loop_exit
      _
    %1671 = vsyncpa [#allocation4], 1
    %s1672 = scalar_lea.sflag [#allocation4], 1
    %1673 = vsyncpa %s1672, 1

</llo_original>
